<compile_context>
chip_gen: v7x
topology: tpu7x:2x2x1
jax: 0.10.0
libtpu: 0.0.40
codegen_flags: <defaults>
</compile_context>

<pallas_src>
import functools
import itertools

import jax
import jax.numpy as jnp
from jax import lax
from jax.experimental import pallas as pl
from jax.experimental.pallas import tpu as pltpu


# ----------------------------- Pallas kernel --------------------------------
def _tta_conv_merge_kernel(x_ref, w_ref, b_ref, out_ref, acc_ref,
                           *, H, W, Wp, n_cls, k_pad, n_tr, inv_n):
    """Grid = (N, C_tiles).  Axis 0: batch (parallel).  Axis 1: channel tiles
    (reduction; out/acc block index constant along it -> resident accumulator).

    x_ref  : (Ct, Ppad2) bf16  zero-padded image of one batch element, spatial
                               dims flattened (row stride Wp = W+2), channel tile Ct
    w_ref  : (9, T*K_pad, Ct) bf16  per-tap flip-equivalent conv weights of ALL
                               T transforms, concatenated along rows
    b_ref  : (K_pad, 1) f32   conv bias (added once in the finalize)
    out_ref: (K, H, W)  f32   merged ('mean') logits, NCHW block for batch n
    acc_ref: (K_pad, H*Wp) f32 scratch accumulator over channel tiles
    """
    c = pl.program_id(1)
    Q = H * Wp  # "extended" pixel count: W real + 2 seam columns per row

    # --- model forward for ALL T transforms on this channel tile -------------
    # flip∘conv∘flip == conv with flipped kernel, so each transform is a conv
    # of the ORIGINAL image; their weights are stacked as rows t*k_pad + k and
    # one matmul per tap serves every transform.  Tap (ky,kx) of output pixel
    # q = y*Wp + x is the flattened padded image at q + ky*Wp + kx.
    merged = jnp.zeros((k_pad, Q), jnp.float32)
    for tap in range(9):
        ky, kx = tap // 3, tap % 3
        off = ky * Wp + kx
        xt = x_ref[:, off:off + Q]                                # (Ct, Q)
        pt = jnp.dot(w_ref[tap], xt,
                     preferred_element_type=jnp.float32)          # (T*k_pad, Q)
        # Merger('mean') append: running sum over the T transform outputs.
        for t in range(n_tr):
            merged = merged + pt[t * k_pad:(t + 1) * k_pad]

    # --- accumulate over channel (reduction) tiles ----------------------------
    @pl.when(c == 0)
    def _():
        acc_ref[...] = merged          # direct store: no zero-init pass

    @pl.when(c > 0)
    def _():
        acc_ref[...] += merged

    # --- finalize: Merger.result ('mean' => sum/n) + bias, crop, emit NCHW ---
    @pl.when(c == pl.num_programs(1) - 1)
    def _():
        res = acc_ref[...] * inv_n + b_ref[...]                   # (k_pad, Q)
        res = res.reshape(k_pad, H, Wp)
        out_ref[...] = res[:n_cls, :, :W].astype(out_ref.dtype)   # drop pads/seam


# ------------------------------ glue (JAX) -----------------------------------
def _round_up(x, m):
    return (x + m - 1) // m * m


def _pick_channel_tile(C):
    # Channel tiles are the reduction axis.  Small C: single tile (block dim
    # equals the full array dim, so the sublane rule is satisfied).  Large C:
    # 8-multiple tiles to bound VMEM (padded image block is Ct * Ppad2 * 2B).
    if C <= 64:
        return C
    for ct in (64, 32, 16, 8):
        if C % ct == 0:
            return ct
    return C  # TODO(synk): pad awkward channel counts instead of one big tile


def _flip_equivalent_weights(w_oihw, transform_params, k_pad):
    """For a stride-1, zero-pad-1 3x3 conv:  flip ∘ conv ∘ flip == conv with the
    spatially flipped kernel (exact).  Returns (9, T*k_pad, C): per-tap weights
    of all T transforms concatenated along rows (row t*k_pad + k)."""
    K, C, _, _ = w_oihw.shape
    ws = []
    for fh, fv in transform_params:
        wt = w_oihw
        if fh:                      # HFlip aug/deaug  -> flip kernel along kx
            wt = wt[:, :, :, ::-1]
        if fv:                      # VFlip aug/deaug  -> flip kernel along ky
            wt = wt[:, :, ::-1, :]
        wt = jnp.transpose(wt, (2, 3, 0, 1)).reshape(9, K, C)     # (tap, k, c)
        wt = jnp.pad(wt, ((0, 0), (0, k_pad - K), (0, 0)))
        ws.append(wt)
    return jnp.concatenate(ws, axis=1)                            # (9, T*k_pad, C)


def segmentation_tta_forward(x_nchw, w_oihw, bias, transform_params,
                             *, compute_dtype=jnp.bfloat16):
    """SegmentationTTAWrapper.forward with merge_mode='mean'. Returns NCHW logits."""
    N, C, H, W = x_nchw.shape
    K = w_oihw.shape[0]
    T = len(transform_params)
    K_pad = 8                       # sublane-pad the tiny class dim inside VMEM only
    Wp = W + 2                      # padded row stride (lane axis of the image)
    Q = H * Wp                      # extended output pixels per image
    Ppad = (H + 2) * Wp             # flattened padded image length
    Ppad2 = _round_up(Ppad + 2, 128)  # room for the largest tap offset, lane aligned

    # Zero-pad spatially, flatten spatial dims into one lane axis, bf16 stream.
    xpad = jnp.pad(x_nchw, ((0, 0), (0, 0), (1, 1), (1, 1)))      # (N,C,H+2,W+2)
    xflat = xpad.reshape(N, C, Ppad)
    xflat = jnp.pad(xflat, ((0, 0), (0, 0), (0, Ppad2 - Ppad))).astype(compute_dtype)

    w_all = _flip_equivalent_weights(w_oihw, transform_params,
                                     K_pad).astype(compute_dtype)  # (9, T*K_pad, C)
    b_col = jnp.pad(bias.astype(jnp.float32).reshape(K, 1),
                    ((0, K_pad - K), (0, 0)))                      # (K_pad, 1)

    Ct = _pick_channel_tile(C)
    grid = (N, C // Ct)

    kernel = functools.partial(
        _tta_conv_merge_kernel,
        H=H, W=W, Wp=Wp, n_cls=K, k_pad=K_pad, n_tr=T, inv_n=1.0 / T)

    out = pl.pallas_call(
        kernel,
        out_shape=jax.ShapeDtypeStruct((N, K, H, W), jnp.float32),
        grid_spec=pltpu.PrefetchScalarGridSpec(
            num_scalar_prefetch=0,
            grid=grid,                       # reduction axis (channels) last
            in_specs=[
                # padded image: one batch element, one channel tile
                pl.BlockSpec((None, Ct, Ppad2), lambda n, c: (n, c, 0)),
                # per-tap weights of all T transforms (tiny, DMA'd once)
                pl.BlockSpec((9, T * K_pad, Ct), lambda n, c: (0, 0, c)),
                # bias (added once in the finalize)
                pl.BlockSpec((K_pad, 1), lambda n, c: (0, 0)),
            ],
            # NCHW output written directly (only K real rows, no post-kernel pass);
            # block index constant along the channel axis.
            out_specs=pl.BlockSpec((None, K, H, W), lambda n, c: (n, 0, 0, 0)),
            scratch_shapes=[pltpu.VMEM((K_pad, Q), jnp.float32)],
        ),
        compiler_params=pltpu.CompilerParams(
            dimension_semantics=("parallel", "arbitrary"),
        ),
    )(xflat, w_all, b_col)
    return out


# ------------------------------ reference ------------------------------------
def _model_ref(x_nchw, w_oihw, bias):
    y = lax.conv_general_dilated(
        x_nchw, w_oihw, window_strides=(1, 1), padding=((1, 1), (1, 1)),
        dimension_numbers=("NCHW", "OIHW", "NCHW"),
    )
    return y + bias.reshape(1, -1, 1, 1)


def _tta_ref(x_nchw, w_oihw, bias, transform_params):
    outs = []
    for fh, fv in transform_params:
        aug = x_nchw
        if fh:
            aug = jnp.flip(aug, axis=3)
        if fv:
            aug = jnp.flip(aug, axis=2)
        y = _model_ref(aug, w_oihw, bias)
        if fv:
            y = jnp.flip(y, axis=2)
        if fh:
            y = jnp.flip(y, axis=3)
        outs.append(y)
    return sum(outs) / len(outs)


# -------------------------------- main ----------------------------------------
if __name__ == "__main__":
    N, C, H, W = 2, 4, 16, 16
    K = 3  # num_classes of the synthetic segmentation head

    key = jax.random.PRNGKey(0)
    kx, kw, kb = jax.random.split(key, 3)
    x = jax.random.normal(kx, (N, C, H, W), dtype=jnp.float32)
    w = jax.random.normal(kw, (K, C, 3, 3), dtype=jnp.float32) * 0.1
    b = jax.random.normal(kb, (K,), dtype=jnp.float32) * 0.1

    # Compose([HFlip(params=[False,True]), VFlip(params=[False,True])]) -> 4 transformers
    transform_params = list(itertools.product([False, True], [False, True]))

    out = segmentation_tta_forward(x, w, b, transform_params)
    out = jax.block_until_ready(out)

    ref = _tta_ref(x, w, b, transform_params)
    assert out.shape == (N, K, H, W)
    # Streamed operands are bf16 (f32 accumulate) -> compare against the exact
    # f32 reference with a tolerance that covers bf16 input quantization.
    assert jnp.allclose(out, ref, rtol=3e-2, atol=3e-2), "mismatch vs. reference"

    print("KERNEL_OK")
</pallas_src>

<mosaic_0001>
module attributes {stable_mosaic.version = 11 : i64} {
  func.func @_tta_conv_merge_kernel(%arg0: i32, %arg1: i32, %arg2: memref<1x4x384xbf16, #tpu.memory_space<vmem>>, %arg3: memref<9x32x4xbf16, #tpu.memory_space<vmem>>, %arg4: memref<8x1xf32, #tpu.memory_space<vmem>>, %arg5: memref<1x3x16x16xf32, #tpu.memory_space<vmem>>, %arg6: memref<8x288xf32, #tpu.memory_space<vmem>>) attributes {dimension_semantics = [#tpu.dimension_semantics<parallel>, #tpu.dimension_semantics<arbitrary>], iteration_bounds = array<i64: 2, 1>, scalar_prefetch = 0 : i64, scratch_operands = 1 : i64, tpu.core_type = #tpu.core_type<tc>, window_params = [{transform_indices = @transform_0, window_bounds = array<i64: 1, 4, 384>}, {transform_indices = @transform_1, window_bounds = array<i64: 9, 32, 4>}, {pipeline_mode = #tpu.pipeline_mode<synchronous>, transform_indices = @transform_2, window_bounds = array<i64: 8, 1>}, {transform_indices = @transform_3, window_bounds = array<i64: 1, 3, 16, 16>}]} {
    %cst = arith.constant 0.000000e+00 : f32
    %0 = vector.broadcast %cst : f32 to vector<8x288xf32>
    %c0 = arith.constant 0 : index
    %c0_0 = arith.constant 0 : index
    %c0_1 = arith.constant 0 : index
    %1 = vector.load %arg2[%c0, %c0_0, %c0_1] : memref<1x4x384xbf16, #tpu.memory_space<vmem>>, vector<1x4x288xbf16>
    %2 = vector.shape_cast %1 : vector<1x4x288xbf16> to vector<4x288xbf16>
    %c0_2 = arith.constant 0 : index
    %c0_3 = arith.constant 0 : index
    %c0_4 = arith.constant 0 : index
    %3 = vector.load %arg3[%c0_2, %c0_3, %c0_4] : memref<9x32x4xbf16, #tpu.memory_space<vmem>>, vector<1x32x4xbf16>
    %4 = vector.shape_cast %3 : vector<1x32x4xbf16> to vector<32x4xbf16>
    %cst_5 = arith.constant dense<0.000000e+00> : vector<32x288xf32>
    %5 = tpu.matmul %4, %2, %cst_5 {dimension_numbers = #tpu.dot_dimension_numbers<[1], [0], [0], [1], [0, 0, 1, 1], [], []>} : vector<32x4xbf16>, vector<4x288xbf16>, vector<32x288xf32> -> vector<32x288xf32>
    %6 = vector.extract_strided_slice %5 {offsets = [0, 0], sizes = [8, 288], strides = [1, 1]} : vector<32x288xf32> to vector<8x288xf32>
    %7 = arith.addf %0, %6 : vector<8x288xf32>
    %8 = vector.extract_strided_slice %5 {offsets = [8, 0], sizes = [8, 288], strides = [1, 1]} : vector<32x288xf32> to vector<8x288xf32>
    %9 = arith.addf %7, %8 : vector<8x288xf32>
    %10 = vector.extract_strided_slice %5 {offsets = [16, 0], sizes = [8, 288], strides = [1, 1]} : vector<32x288xf32> to vector<8x288xf32>
    %11 = arith.addf %9, %10 : vector<8x288xf32>
    %12 = vector.extract_strided_slice %5 {offsets = [24, 0], sizes = [8, 288], strides = [1, 1]} : vector<32x288xf32> to vector<8x288xf32>
    %13 = arith.addf %11, %12 : vector<8x288xf32>
    %c0_6 = arith.constant 0 : index
    %c0_7 = arith.constant 0 : index
    %c1 = arith.constant 1 : index
    %14 = vector.load %arg2[%c0_6, %c0_7, %c1] : memref<1x4x384xbf16, #tpu.memory_space<vmem>>, vector<1x4x288xbf16>
    %15 = vector.shape_cast %14 : vector<1x4x288xbf16> to vector<4x288xbf16>
    %c1_8 = arith.constant 1 : index
    %c0_9 = arith.constant 0 : index
    %c0_10 = arith.constant 0 : index
    %16 = vector.load %arg3[%c1_8, %c0_9, %c0_10] : memref<9x32x4xbf16, #tpu.memory_space<vmem>>, vector<1x32x4xbf16>
    %17 = vector.shape_cast %16 : vector<1x32x4xbf16> to vector<32x4xbf16>
    %cst_11 = arith.constant dense<0.000000e+00> : vector<32x288xf32>
    %18 = tpu.matmul %17, %15, %cst_11 {dimension_numbers = #tpu.dot_dimension_numbers<[1], [0], [0], [1], [0, 0, 1, 1], [], []>} : vector<32x4xbf16>, vector<4x288xbf16>, vector<32x288xf32> -> vector<32x288xf32>
    %19 = vector.extract_strided_slice %18 {offsets = [0, 0], sizes = [8, 288], strides = [1, 1]} : vector<32x288xf32> to vector<8x288xf32>
    %20 = arith.addf %13, %19 : vector<8x288xf32>
    %21 = vector.extract_strided_slice %18 {offsets = [8, 0], sizes = [8, 288], strides = [1, 1]} : vector<32x288xf32> to vector<8x288xf32>
    %22 = arith.addf %20, %21 : vector<8x288xf32>
    %23 = vector.extract_strided_slice %18 {offsets = [16, 0], sizes = [8, 288], strides = [1, 1]} : vector<32x288xf32> to vector<8x288xf32>
    %24 = arith.addf %22, %23 : vector<8x288xf32>
    %25 = vector.extract_strided_slice %18 {offsets = [24, 0], sizes = [8, 288], strides = [1, 1]} : vector<32x288xf32> to vector<8x288xf32>
    %26 = arith.addf %24, %25 : vector<8x288xf32>
    %c0_12 = arith.constant 0 : index
    %c0_13 = arith.constant 0 : index
    %c2 = arith.constant 2 : index
    %27 = vector.load %arg2[%c0_12, %c0_13, %c2] : memref<1x4x384xbf16, #tpu.memory_space<vmem>>, vector<1x4x288xbf16>
    %28 = vector.shape_cast %27 : vector<1x4x288xbf16> to vector<4x288xbf16>
    %c2_14 = arith.constant 2 : index
    %c0_15 = arith.constant 0 : index
    %c0_16 = arith.constant 0 : index
    %29 = vector.load %arg3[%c2_14, %c0_15, %c0_16] : memref<9x32x4xbf16, #tpu.memory_space<vmem>>, vector<1x32x4xbf16>
    %30 = vector.shape_cast %29 : vector<1x32x4xbf16> to vector<32x4xbf16>
    %cst_17 = arith.constant dense<0.000000e+00> : vector<32x288xf32>
    %31 = tpu.matmul %30, %28, %cst_17 {dimension_numbers = #tpu.dot_dimension_numbers<[1], [0], [0], [1], [0, 0, 1, 1], [], []>} : vector<32x4xbf16>, vector<4x288xbf16>, vector<32x288xf32> -> vector<32x288xf32>
    %32 = vector.extract_strided_slice %31 {offsets = [0, 0], sizes = [8, 288], strides = [1, 1]} : vector<32x288xf32> to vector<8x288xf32>
    %33 = arith.addf %26, %32 : vector<8x288xf32>
    %34 = vector.extract_strided_slice %31 {offsets = [8, 0], sizes = [8, 288], strides = [1, 1]} : vector<32x288xf32> to vector<8x288xf32>
    %35 = arith.addf %33, %34 : vector<8x288xf32>
    %36 = vector.extract_strided_slice %31 {offsets = [16, 0], sizes = [8, 288], strides = [1, 1]} : vector<32x288xf32> to vector<8x288xf32>
    %37 = arith.addf %35, %36 : vector<8x288xf32>
    %38 = vector.extract_strided_slice %31 {offsets = [24, 0], sizes = [8, 288], strides = [1, 1]} : vector<32x288xf32> to vector<8x288xf32>
    %39 = arith.addf %37, %38 : vector<8x288xf32>
    %c0_18 = arith.constant 0 : index
    %c0_19 = arith.constant 0 : index
    %c18 = arith.constant 18 : index
    %40 = vector.load %arg2[%c0_18, %c0_19, %c18] : memref<1x4x384xbf16, #tpu.memory_space<vmem>>, vector<1x4x288xbf16>
    %41 = vector.shape_cast %40 : vector<1x4x288xbf16> to vector<4x288xbf16>
    %c3 = arith.constant 3 : index
    %c0_20 = arith.constant 0 : index
    %c0_21 = arith.constant 0 : index
    %42 = vector.load %arg3[%c3, %c0_20, %c0_21] : memref<9x32x4xbf16, #tpu.memory_space<vmem>>, vector<1x32x4xbf16>
    %43 = vector.shape_cast %42 : vector<1x32x4xbf16> to vector<32x4xbf16>
    %cst_22 = arith.constant dense<0.000000e+00> : vector<32x288xf32>
    %44 = tpu.matmul %43, %41, %cst_22 {dimension_numbers = #tpu.dot_dimension_numbers<[1], [0], [0], [1], [0, 0, 1, 1], [], []>} : vector<32x4xbf16>, vector<4x288xbf16>, vector<32x288xf32> -> vector<32x288xf32>
    %45 = vector.extract_strided_slice %44 {offsets = [0, 0], sizes = [8, 288], strides = [1, 1]} : vector<32x288xf32> to vector<8x288xf32>
    %46 = arith.addf %39, %45 : vector<8x288xf32>
    %47 = vector.extract_strided_slice %44 {offsets = [8, 0], sizes = [8, 288], strides = [1, 1]} : vector<32x288xf32> to vector<8x288xf32>
    %48 = arith.addf %46, %47 : vector<8x288xf32>
    %49 = vector.extract_strided_slice %44 {offsets = [16, 0], sizes = [8, 288], strides = [1, 1]} : vector<32x288xf32> to vector<8x288xf32>
    %50 = arith.addf %48, %49 : vector<8x288xf32>
    %51 = vector.extract_strided_slice %44 {offsets = [24, 0], sizes = [8, 288], strides = [1, 1]} : vector<32x288xf32> to vector<8x288xf32>
    %52 = arith.addf %50, %51 : vector<8x288xf32>
    %c0_23 = arith.constant 0 : index
    %c0_24 = arith.constant 0 : index
    %c19 = arith.constant 19 : index
    %53 = vector.load %arg2[%c0_23, %c0_24, %c19] : memref<1x4x384xbf16, #tpu.memory_space<vmem>>, vector<1x4x288xbf16>
    %54 = vector.shape_cast %53 : vector<1x4x288xbf16> to vector<4x288xbf16>
    %c4 = arith.constant 4 : index
    %c0_25 = arith.constant 0 : index
    %c0_26 = arith.constant 0 : index
    %55 = vector.load %arg3[%c4, %c0_25, %c0_26] : memref<9x32x4xbf16, #tpu.memory_space<vmem>>, vector<1x32x4xbf16>
    %56 = vector.shape_cast %55 : vector<1x32x4xbf16> to vector<32x4xbf16>
    %cst_27 = arith.constant dense<0.000000e+00> : vector<32x288xf32>
    %57 = tpu.matmul %56, %54, %cst_27 {dimension_numbers = #tpu.dot_dimension_numbers<[1], [0], [0], [1], [0, 0, 1, 1], [], []>} : vector<32x4xbf16>, vector<4x288xbf16>, vector<32x288xf32> -> vector<32x288xf32>
    %58 = vector.extract_strided_slice %57 {offsets = [0, 0], sizes = [8, 288], strides = [1, 1]} : vector<32x288xf32> to vector<8x288xf32>
    %59 = arith.addf %52, %58 : vector<8x288xf32>
    %60 = vector.extract_strided_slice %57 {offsets = [8, 0], sizes = [8, 288], strides = [1, 1]} : vector<32x288xf32> to vector<8x288xf32>
    %61 = arith.addf %59, %60 : vector<8x288xf32>
    %62 = vector.extract_strided_slice %57 {offsets = [16, 0], sizes = [8, 288], strides = [1, 1]} : vector<32x288xf32> to vector<8x288xf32>
    %63 = arith.addf %61, %62 : vector<8x288xf32>
    %64 = vector.extract_strided_slice %57 {offsets = [24, 0], sizes = [8, 288], strides = [1, 1]} : vector<32x288xf32> to vector<8x288xf32>
    %65 = arith.addf %63, %64 : vector<8x288xf32>
    %c0_28 = arith.constant 0 : index
    %c0_29 = arith.constant 0 : index
    %c20 = arith.constant 20 : index
    %66 = vector.load %arg2[%c0_28, %c0_29, %c20] : memref<1x4x384xbf16, #tpu.memory_space<vmem>>, vector<1x4x288xbf16>
    %67 = vector.shape_cast %66 : vector<1x4x288xbf16> to vector<4x288xbf16>
    %c5 = arith.constant 5 : index
    %c0_30 = arith.constant 0 : index
    %c0_31 = arith.constant 0 : index
    %68 = vector.load %arg3[%c5, %c0_30, %c0_31] : memref<9x32x4xbf16, #tpu.memory_space<vmem>>, vector<1x32x4xbf16>
    %69 = vector.shape_cast %68 : vector<1x32x4xbf16> to vector<32x4xbf16>
    %cst_32 = arith.constant dense<0.000000e+00> : vector<32x288xf32>
    %70 = tpu.matmul %69, %67, %cst_32 {dimension_numbers = #tpu.dot_dimension_numbers<[1], [0], [0], [1], [0, 0, 1, 1], [], []>} : vector<32x4xbf16>, vector<4x288xbf16>, vector<32x288xf32> -> vector<32x288xf32>
    %71 = vector.extract_strided_slice %70 {offsets = [0, 0], sizes = [8, 288], strides = [1, 1]} : vector<32x288xf32> to vector<8x288xf32>
    %72 = arith.addf %65, %71 : vector<8x288xf32>
    %73 = vector.extract_strided_slice %70 {offsets = [8, 0], sizes = [8, 288], strides = [1, 1]} : vector<32x288xf32> to vector<8x288xf32>
    %74 = arith.addf %72, %73 : vector<8x288xf32>
    %75 = vector.extract_strided_slice %70 {offsets = [16, 0], sizes = [8, 288], strides = [1, 1]} : vector<32x288xf32> to vector<8x288xf32>
    %76 = arith.addf %74, %75 : vector<8x288xf32>
    %77 = vector.extract_strided_slice %70 {offsets = [24, 0], sizes = [8, 288], strides = [1, 1]} : vector<32x288xf32> to vector<8x288xf32>
    %78 = arith.addf %76, %77 : vector<8x288xf32>
    %c0_33 = arith.constant 0 : index
    %c0_34 = arith.constant 0 : index
    %c36 = arith.constant 36 : index
    %79 = vector.load %arg2[%c0_33, %c0_34, %c36] : memref<1x4x384xbf16, #tpu.memory_space<vmem>>, vector<1x4x288xbf16>
    %80 = vector.shape_cast %79 : vector<1x4x288xbf16> to vector<4x288xbf16>
    %c6 = arith.constant 6 : index
    %c0_35 = arith.constant 0 : index
    %c0_36 = arith.constant 0 : index
    %81 = vector.load %arg3[%c6, %c0_35, %c0_36] : memref<9x32x4xbf16, #tpu.memory_space<vmem>>, vector<1x32x4xbf16>
    %82 = vector.shape_cast %81 : vector<1x32x4xbf16> to vector<32x4xbf16>
    %cst_37 = arith.constant dense<0.000000e+00> : vector<32x288xf32>
    %83 = tpu.matmul %82, %80, %cst_37 {dimension_numbers = #tpu.dot_dimension_numbers<[1], [0], [0], [1], [0, 0, 1, 1], [], []>} : vector<32x4xbf16>, vector<4x288xbf16>, vector<32x288xf32> -> vector<32x288xf32>
    %84 = vector.extract_strided_slice %83 {offsets = [0, 0], sizes = [8, 288], strides = [1, 1]} : vector<32x288xf32> to vector<8x288xf32>
    %85 = arith.addf %78, %84 : vector<8x288xf32>
    %86 = vector.extract_strided_slice %83 {offsets = [8, 0], sizes = [8, 288], strides = [1, 1]} : vector<32x288xf32> to vector<8x288xf32>
    %87 = arith.addf %85, %86 : vector<8x288xf32>
    %88 = vector.extract_strided_slice %83 {offsets = [16, 0], sizes = [8, 288], strides = [1, 1]} : vector<32x288xf32> to vector<8x288xf32>
    %89 = arith.addf %87, %88 : vector<8x288xf32>
    %90 = vector.extract_strided_slice %83 {offsets = [24, 0], sizes = [8, 288], strides = [1, 1]} : vector<32x288xf32> to vector<8x288xf32>
    %91 = arith.addf %89, %90 : vector<8x288xf32>
    %c0_38 = arith.constant 0 : index
    %c0_39 = arith.constant 0 : index
    %c37 = arith.constant 37 : index
    %92 = vector.load %arg2[%c0_38, %c0_39, %c37] : memref<1x4x384xbf16, #tpu.memory_space<vmem>>, vector<1x4x288xbf16>
    %93 = vector.shape_cast %92 : vector<1x4x288xbf16> to vector<4x288xbf16>
    %c7 = arith.constant 7 : index
    %c0_40 = arith.constant 0 : index
    %c0_41 = arith.constant 0 : index
    %94 = vector.load %arg3[%c7, %c0_40, %c0_41] : memref<9x32x4xbf16, #tpu.memory_space<vmem>>, vector<1x32x4xbf16>
    %95 = vector.shape_cast %94 : vector<1x32x4xbf16> to vector<32x4xbf16>
    %cst_42 = arith.constant dense<0.000000e+00> : vector<32x288xf32>
    %96 = tpu.matmul %95, %93, %cst_42 {dimension_numbers = #tpu.dot_dimension_numbers<[1], [0], [0], [1], [0, 0, 1, 1], [], []>} : vector<32x4xbf16>, vector<4x288xbf16>, vector<32x288xf32> -> vector<32x288xf32>
    %97 = vector.extract_strided_slice %96 {offsets = [0, 0], sizes = [8, 288], strides = [1, 1]} : vector<32x288xf32> to vector<8x288xf32>
    %98 = arith.addf %91, %97 : vector<8x288xf32>
    %99 = vector.extract_strided_slice %96 {offsets = [8, 0], sizes = [8, 288], strides = [1, 1]} : vector<32x288xf32> to vector<8x288xf32>
    %100 = arith.addf %98, %99 : vector<8x288xf32>
    %101 = vector.extract_strided_slice %96 {offsets = [16, 0], sizes = [8, 288], strides = [1, 1]} : vector<32x288xf32> to vector<8x288xf32>
    %102 = arith.addf %100, %101 : vector<8x288xf32>
    %103 = vector.extract_strided_slice %96 {offsets = [24, 0], sizes = [8, 288], strides = [1, 1]} : vector<32x288xf32> to vector<8x288xf32>
    %104 = arith.addf %102, %103 : vector<8x288xf32>
    %c0_43 = arith.constant 0 : index
    %c0_44 = arith.constant 0 : index
    %c38 = arith.constant 38 : index
    %105 = vector.load %arg2[%c0_43, %c0_44, %c38] : memref<1x4x384xbf16, #tpu.memory_space<vmem>>, vector<1x4x288xbf16>
    %106 = vector.shape_cast %105 : vector<1x4x288xbf16> to vector<4x288xbf16>
    %c8 = arith.constant 8 : index
    %c0_45 = arith.constant 0 : index
    %c0_46 = arith.constant 0 : index
    %107 = vector.load %arg3[%c8, %c0_45, %c0_46] : memref<9x32x4xbf16, #tpu.memory_space<vmem>>, vector<1x32x4xbf16>
    %108 = vector.shape_cast %107 : vector<1x32x4xbf16> to vector<32x4xbf16>
    %cst_47 = arith.constant dense<0.000000e+00> : vector<32x288xf32>
    %109 = tpu.matmul %108, %106, %cst_47 {dimension_numbers = #tpu.dot_dimension_numbers<[1], [0], [0], [1], [0, 0, 1, 1], [], []>} : vector<32x4xbf16>, vector<4x288xbf16>, vector<32x288xf32> -> vector<32x288xf32>
    %110 = vector.extract_strided_slice %109 {offsets = [0, 0], sizes = [8, 288], strides = [1, 1]} : vector<32x288xf32> to vector<8x288xf32>
    %111 = arith.addf %104, %110 : vector<8x288xf32>
    %112 = vector.extract_strided_slice %109 {offsets = [8, 0], sizes = [8, 288], strides = [1, 1]} : vector<32x288xf32> to vector<8x288xf32>
    %113 = arith.addf %111, %112 : vector<8x288xf32>
    %114 = vector.extract_strided_slice %109 {offsets = [16, 0], sizes = [8, 288], strides = [1, 1]} : vector<32x288xf32> to vector<8x288xf32>
    %115 = arith.addf %113, %114 : vector<8x288xf32>
    %116 = vector.extract_strided_slice %109 {offsets = [24, 0], sizes = [8, 288], strides = [1, 1]} : vector<32x288xf32> to vector<8x288xf32>
    %117 = arith.addf %115, %116 : vector<8x288xf32>
    %c0_i32 = arith.constant 0 : i32
    %118 = arith.cmpi eq, %arg1, %c0_i32 : i32
    %119 = arith.extui %118 : i1 to i32
    %c0_i32_48 = arith.constant 0 : i32
    %120 = arith.cmpi ne, %119, %c0_i32_48 : i32
    scf.if %120 {
      %c0_53 = arith.constant 0 : index
      %c0_54 = arith.constant 0 : index
      %127 = vector.load %arg6[%c0_53, %c0_54] : memref<8x288xf32, #tpu.memory_space<vmem>>, vector<8x288xf32>
      tpu.vector_store %arg6[%c0_53, %c0_54], %117 {strides = array<i32>} : memref<8x288xf32, #tpu.memory_space<vmem>>, vector<8x288xf32>,
    } else {
    }
    %c0_i32_49 = arith.constant 0 : i32
    %121 = arith.cmpi sgt, %arg1, %c0_i32_49 : i32
    %122 = arith.extui %121 : i1 to i32
    %c0_i32_50 = arith.constant 0 : i32
    %123 = arith.cmpi ne, %122, %c0_i32_50 : i32
    scf.if %123 {
      %c0_53 = arith.constant 0 : index
      %c0_54 = arith.constant 0 : index
      %127 = vector.load %arg6[%c0_53, %c0_54] : memref<8x288xf32, #tpu.memory_space<vmem>>, vector<8x288xf32>
      %128 = arith.addf %127, %117 : vector<8x288xf32>
      %c0_55 = arith.constant 0 : index
      %c0_56 = arith.constant 0 : index
      %129 = vector.load %arg6[%c0_55, %c0_56] : memref<8x288xf32, #tpu.memory_space<vmem>>, vector<8x288xf32>
      tpu.vector_store %arg6[%c0_55, %c0_56], %128 {strides = array<i32>} : memref<8x288xf32, #tpu.memory_space<vmem>>, vector<8x288xf32>,
    } else {
    }
    %c0_i32_51 = arith.constant 0 : i32
    %124 = arith.cmpi eq, %arg1, %c0_i32_51 : i32
    %125 = arith.extui %124 : i1 to i32
    %c0_i32_52 = arith.constant 0 : i32
    %126 = arith.cmpi ne, %125, %c0_i32_52 : i32
    scf.if %126 {
      %c0_53 = arith.constant 0 : index
      %c0_54 = arith.constant 0 : index
      %127 = vector.load %arg6[%c0_53, %c0_54] : memref<8x288xf32, #tpu.memory_space<vmem>>, vector<8x288xf32>
      %cst_55 = arith.constant 2.500000e-01 : f32
      %128 = vector.broadcast %cst_55 : f32 to vector<8x288xf32>
      %129 = arith.mulf %127, %128 : vector<8x288xf32>
      %c0_56 = arith.constant 0 : index
      %c0_57 = arith.constant 0 : index
      %130 = vector.load %arg4[%c0_56, %c0_57] : memref<8x1xf32, #tpu.memory_space<vmem>>, vector<8x1xf32>
      %131 = vector.broadcast %130 : vector<8x1xf32> to vector<8x288xf32>
      %132 = arith.addf %129, %131 : vector<8x288xf32>
      %133 = vector.shape_cast %132 : vector<8x288xf32> to vector<8x16x18xf32>
      %134 = vector.extract_strided_slice %133 {offsets = [0, 0, 0], sizes = [3, 16, 16], strides = [1, 1, 1]} : vector<8x16x18xf32> to vector<3x16x16xf32>
      %c0_58 = arith.constant 0 : index
      %c0_59 = arith.constant 0 : index
      %c0_60 = arith.constant 0 : index
      %c0_61 = arith.constant 0 : index
      %135 = vector.load %arg5[%c0_58, %c0_59, %c0_60, %c0_61] : memref<1x3x16x16xf32, #tpu.memory_space<vmem>>, vector<1x3x16x16xf32>
      %136 = vector.shape_cast %135 : vector<1x3x16x16xf32> to vector<3x16x16xf32>
      %137 = vector.shape_cast %134 : vector<3x16x16xf32> to vector<1x3x16x16xf32>
      tpu.vector_store %arg5[%c0_58, %c0_59, %c0_60, %c0_61], %137 {strides = array<i32>} : memref<1x3x16x16xf32, #tpu.memory_space<vmem>>, vector<1x3x16x16xf32>,
    } else {
    }
    return
  }
  func.func @transform_0(%arg0: i32, %arg1: i32) -> (i32, i32, i32) {
    %c0_i32 = arith.constant 0 : i32
    %c0_i32_0 = arith.constant 0 : i32
    return %arg0, %arg1, %c0_i32 : i32, i32, i32
  }
  func.func @transform_1(%arg0: i32, %arg1: i32) -> (i32, i32, i32) {
    %c0_i32 = arith.constant 0 : i32
    %c0_i32_0 = arith.constant 0 : i32
    %c0_i32_1 = arith.constant 0 : i32
    return %c0_i32, %c0_i32_0, %arg1 : i32, i32, i32
  }
  func.func @transform_2(%arg0: i32, %arg1: i32) -> (i32, i32) {
    %c0_i32 = arith.constant 0 : i32
    %c0_i32_0 = arith.constant 0 : i32
    %c0_i32_1 = arith.constant 0 : i32
    return %c0_i32, %c0_i32_0 : i32, i32
  }
  func.func @transform_3(%arg0: i32, %arg1: i32) -> (i32, i32, i32, i32) {
    %c0_i32 = arith.constant 0 : i32
    %c0_i32_0 = arith.constant 0 : i32
    %c0_i32_1 = arith.constant 0 : i32
    %c0_i32_2 = arith.constant 0 : i32
    return %arg0, %c0_i32, %c0_i32_0, %c0_i32_1 : i32, i32, i32, i32
  }
}

</mosaic_0001>

<llo_original>
// kernel: tpu_custom_call.1
$region0: #{tpu_custom_call.1}
  #allocation0 [shape = 'u32[]', space=smem, size = 0x4, offset = 0x4, fixed_abs, tag = 'smem constant byte address 0x4 - core index']
  #allocation1 [shape = 'u32[144,128]{1,0:T(1,128)}', space=vmem, size = 0x12000, scoped, tag = 'internal scratch']
  #allocation2 [shape = 'f32[8,288]{1,0:T(8,128)}', space=vmem, size = 0x3000, scoped, tag = 'scratch operand']
  %s0 = inlined_call_operand.vmem [shape: bf16[2,4,384], index: 0, kind: input, shape index: {}]
  %s1 = inlined_call_operand.vmem [shape: bf16[9,32,4], index: 1, kind: input, shape index: {}]
  %s2 = inlined_call_operand.vmem [shape: f32[8,1], index: 2, kind: input, shape index: {}]
  %s3 = inlined_call_operand.hbm [shape: f32[2,3,16,16], index: 3, kind: output, shape index: {}]
  %s4 = sld [smem:[#allocation0]]
  $region57: #{tpu_custom_call.1} parent=0
    _
  %s6 = ssub.s32 1, %s4
  %s7 = scalar_select 0, %s6, %s4
  $region1: #{tpu_custom_call.1} parent=0
    #allocation3 [shape = 'u8[49152]{0}', space=vmem, size = 0xc000, scoped, tag = 'output window, operand 0']
    #allocation4 [shape = 's32[2]{0}', space=sflag, size = 0x8, scoped, tag = 'scoped memory for tpu_custom_call.1']
    %8 = vsyncpa [#allocation4], 0
    %s9 = scalar_lea.sflag [#allocation4], 1
    %10 = vsyncpa %s9, 0
    loop: start=0, step=1, limit=4
    $region2: #{tpu_custom_call.1} parent=1 // loop_pre_header
      _
    $region3: #{tpu_custom_call.1} parent=1 // loop_header
      %s12 = sphi 0, %s16
      %p13 = scmp.ge.s32.totalorder %s12, 4
      %s19 = sphi 0, %s31
      %s20 = sphi 0, %s27
      %s21 = sphi 0, %s19
      %s22 = sphi 0, %s20
      %s23 = sphi 0, %s21
      %s24 = sphi 0, %s22
      %s36 = sphi 0, %s38
      %s39 = sphi 0, %s36
      %s40 = sphi 0, %s39
      %s56 = sphi 0, %s40
      %s62 = sphi 0, %s64
      %s65 = sphi 0, %s62
      %s66 = sphi 0, %s65
      %s82 = sphi 0, %s66
      %s86 = sphi 0, %s86
      %s88 = sphi 0, %s86
      %s89 = sphi 0, %s88
      %s103 = sphi 0, %s89
      %s109 = sphi 0, %s111
      %s112 = sphi 0, %s109
      %s113 = sphi 0, %s112
      %s129 = sphi 0, %s113
    $region4: #{tpu_custom_call.1} parent=1 // loop_header_branch
      %15 = sbr.rel (%p13) target = $region8
    $region5: #{tpu_custom_call.1} parent=1 // loop_body
      %s17 = ssub.s32 %s12, 1
      %s18 = ssub.s32 %s12, 2
      %s25 = sadd.s32 1, %s20
      %p26 = scmp.ge.s32.totalorder %s25, 1
      %s27 = scalar_select %p26, 0, %s25
      %s28 = sadd.s32 1, %s19
      %s29 = scalar_select %p26, %s28, %s19
      %p30 = scmp.ge.s32.totalorder %s29, 2
      %s31 = scalar_select %p30, 0, %s29
      %s32 = ssub.s32 %s19, %s31
      %s33 = ssub.s32 %s20, %s27
      %s34 = sor.u32 %s32, %s33
      %p35 = scmp.eq.s32.totalorder %s34, 0
      %s37 = sadd.s32 %s36, 1
      %s38 = scalar_select %p35, %s36, %s37
      %p41 = pneg %p35
      %p42 = scmp.eq.s32.totalorder %s12, 1
      %p43 = por %p41, %p42
      %p44 = scmp.ne.s32.totalorder %s36, %s39
      %p45 = scmp.eq.s32.totalorder %s12, 0
      %p46 = por %p44, %p45
      %p47 = scmp.ne.s32.totalorder %s36, %s39
      %p48 = scmp.eq.s32.totalorder %s17, 1
      %p49 = por %p47, %p48
      %p50 = scmp.ne.s32.totalorder %s39, %s40
      %p51 = scmp.eq.s32.totalorder %s17, 0
      %p52 = por %p50, %p51
      %p53 = scmp.ne.s32.totalorder %s39, %s40
      %p54 = scmp.eq.s32.totalorder %s18, 1
      %p55 = por %p53, %p54
      %p57 = scmp.ne.s32.totalorder %s40, %s56
      %p58 = scmp.eq.s32.totalorder %s18, 0
      %p59 = por %p57, %p58
      %s60 = ssub.s32 %s20, %s27
      %p61 = scmp.eq.s32.totalorder %s60, 0
      %s63 = sadd.s32 %s62, 1
      %s64 = scalar_select %p61, %s62, %s63
      %p67 = pneg %p61
      %p68 = scmp.eq.s32.totalorder %s12, 1
      %p69 = por %p67, %p68
      %p70 = scmp.ne.s32.totalorder %s62, %s65
      %p71 = scmp.eq.s32.totalorder %s12, 0
      %p72 = por %p70, %p71
      %p73 = scmp.ne.s32.totalorder %s62, %s65
      %p74 = scmp.eq.s32.totalorder %s17, 1
      %p75 = por %p73, %p74
      %p76 = scmp.ne.s32.totalorder %s65, %s66
      %p77 = scmp.eq.s32.totalorder %s17, 0
      %p78 = por %p76, %p77
      %p79 = scmp.ne.s32.totalorder %s65, %s66
      %p80 = scmp.eq.s32.totalorder %s18, 1
      %p81 = por %p79, %p80
      %p83 = scmp.ne.s32.totalorder %s66, %s82
      %p84 = scmp.eq.s32.totalorder %s18, 0
      %p85 = por %p83, %p84
      %s87 = sadd.s32 %s86, 1
      %p90 = scmp.eq.s32.totalorder %s12, 1
      %p91 = scmp.ne.s32.totalorder %s86, %s88
      %p92 = scmp.eq.s32.totalorder %s12, 0
      %p93 = por %p91, %p92
      %p94 = scmp.ne.s32.totalorder %s86, %s88
      %p95 = scmp.eq.s32.totalorder %s17, 1
      %p96 = por %p94, %p95
      %p97 = scmp.ne.s32.totalorder %s88, %s89
      %p98 = scmp.eq.s32.totalorder %s17, 0
      %p99 = por %p97, %p98
      %p100 = scmp.ne.s32.totalorder %s88, %s89
      %p101 = scmp.eq.s32.totalorder %s18, 1
      %p102 = por %p100, %p101
      %p104 = scmp.ne.s32.totalorder %s89, %s103
      %p105 = scmp.eq.s32.totalorder %s18, 0
      %p106 = por %p104, %p105
      %s107 = ssub.s32 %s19, %s31
      %p108 = scmp.eq.s32.totalorder %s107, 0
      %s110 = sadd.s32 %s109, 1
      %s111 = scalar_select %p108, %s109, %s110
      %p114 = pneg %p108
      %p115 = scmp.eq.s32.totalorder %s12, 1
      %p116 = por %p114, %p115
      %p117 = scmp.ne.s32.totalorder %s109, %s112
      %p118 = scmp.eq.s32.totalorder %s12, 0
      %p119 = por %p117, %p118
      %p120 = scmp.ne.s32.totalorder %s109, %s112
      %p121 = scmp.eq.s32.totalorder %s17, 1
      %p122 = por %p120, %p121
      %p123 = scmp.ne.s32.totalorder %s112, %s113
      %p124 = scmp.eq.s32.totalorder %s17, 0
      %p125 = por %p123, %p124
      %p126 = scmp.ne.s32.totalorder %s112, %s113
      %p127 = scmp.eq.s32.totalorder %s18, 1
      %p128 = por %p126, %p127
      %p130 = scmp.ne.s32.totalorder %s113, %s129
      %p131 = scmp.eq.s32.totalorder %s18, 0
      %p132 = por %p130, %p131
      %p133 = scmp.le.s32.totalorder 1, %s12
      %p134 = scmp.lt.s32.totalorder %s12, 3
      %p135 = pnand %p133, %p134
      %p136 = pneg %p135
      // Predicated region
      $region9: #{tpu_custom_call.1} parent=5 // pred_check
        _
      $region10: #{tpu_custom_call.1} parent=5 // pred_check_branch
        %138 = sbr.rel (%p135) target = $region12
      $region11: #{tpu_custom_call.1} parent=5 // pred_region
        %s139 = ssub.s32 %s12, 1
        // Predicated region
        $region13: #{tpu_custom_call.1} parent=11 // pred_check
          %p140 = pneg %p78
        $region14: #{tpu_custom_call.1} parent=11 // pred_check_branch
          %142 = sbr.rel (%p140) target = $region16
        $region15: #{tpu_custom_call.1} parent=11 // pred_region
          %p143 = scmp.lt.s32.totalorder %s22, 0
          %s144 = scalar_select %p143, %s22, 0
          %s145 = smul.addr %s144, 4
          %s146 = scalar_lea.vmem %s1, %s145
        $region16: #{tpu_custom_call.1} parent=11 // pred_fallthru
          _
        // Predicated region
        $region17: #{tpu_custom_call.1} parent=11 // pred_check
          %p147 = pneg %p99
        $region18: #{tpu_custom_call.1} parent=11 // pred_check_branch
          %149 = sbr.rel (%p147) target = $region20
        $region19: #{tpu_custom_call.1} parent=11 // pred_region
          _
        $region20: #{tpu_custom_call.1} parent=11 // pred_fallthru
          _
      $region12: #{tpu_custom_call.1} parent=5 // pred_fallthru
        _
      %p150 = scmp.lt.s32.totalorder %s12, 2
      // Predicated region
      $region21: #{tpu_custom_call.1} parent=5 // pred_check
        %p151 = pneg %p150
      $region22: #{tpu_custom_call.1} parent=5 // pred_check_branch
        %153 = sbr.rel (%p151) target = $region24
      $region23: #{tpu_custom_call.1} parent=5 // pred_region
        // Predicated region
        $region25: #{tpu_custom_call.1} parent=23 // pred_check
          %p154 = pneg %p46
        $region26: #{tpu_custom_call.1} parent=23 // pred_check_branch
          %156 = sbr.rel (%p154) target = $region28
        $region27: #{tpu_custom_call.1} parent=23 // pred_region
          %p157 = scmp.lt.s32.totalorder %s19, 1
          %s158 = scalar_select %p157, %s19, 1
          %p159 = scmp.lt.s32.totalorder %s20, 0
          %s160 = scalar_select %p159, %s20, 0
          %s161 = smul.addr %s160, 3
          %s162 = smul.addr %s158, 3
          %s163 = sadd.s32 %s161, %s162
          %s164 = smul.addr %s163, 2
          %s165 = scalar_lea.vmem %s0, %s164
        $region28: #{tpu_custom_call.1} parent=23 // pred_fallthru
          _
      $region24: #{tpu_custom_call.1} parent=5 // pred_fallthru
        _
      %p166 = scmp.le.s32.totalorder 1, %s12
      %p167 = scmp.lt.s32.totalorder %s12, 3
      %p168 = pnand %p166, %p167
      %p169 = pneg %p168
      // Predicated region
      $region29: #{tpu_custom_call.1} parent=5 // pred_check
        _
      $region30: #{tpu_custom_call.1} parent=5 // pred_check_branch
        %171 = sbr.rel (%p168) target = $region32
      $region31: #{tpu_custom_call.1} parent=5 // pred_region
        %s172 = ssub.s32 %s12, 1
        %p173 = scmp.lt.s32.totalorder %s21, 1
        %s174 = scalar_select %p173, %s21, 1
        %p175 = scmp.lt.s32.totalorder %s22, 0
        %s176 = scalar_select %p175, %s22, 0
        %s177 = smul.addr %s176, 3
        %s178 = smul.addr %s174, 3
        %s179 = sadd.s32 %s177, %s178
        %s180 = smul.addr %s179, 2
        %s181 = scalar_lea.vmem %s0, %s180
        %p182 = pneg %p52
        %p183 = pneg %p49
        %p184 = scmp.lt.s32.totalorder %s22, 0
        %s185 = scalar_select %p184, %s22, 0
        %s186 = smul.addr %s185, 4
        %s187 = scalar_lea.vmem %s1, %s186
        %p188 = pneg %p78
        %p189 = pneg %p75
        %p190 = pneg %p99
        %p191 = pneg %p96
        %p192 = pneg %p125
        %p193 = pneg %p122
        %s194 = sand.u32 %s112, 1
        %s195 = scalar_lea.sflag [#allocation4], %s194
        %s196 = sand.u32 %s112, 1
        %s197 = smul.addr %s196, 48
        %s198 = scalar_lea.vmem [#allocation3], %s197
        %p199 = scmp.lt.s32.totalorder %s21, 1
        %s200 = scalar_select %p199, %s21, 1
        %p201 = scmp.lt.s32.totalorder %s22, 0
        %s202 = scalar_select %p201, %s22, 0
        %s203 = smul.addr %s202, 3
        %s204 = smul.addr %s200, 3
        %s205 = sadd.s32 %s203, %s204
        %s206 = smul.addr %s205, 2
        %s207 = scalar_lea.vmem %s0, %s206
        %p208 = scmp.lt.s32.totalorder %s22, 0
        %s209 = scalar_select %p208, %s22, 0
        %s210 = smul.addr %s209, 4
        %s211 = scalar_lea.vmem %s1, %s210
        %v213 = vld [vmem:[%s207] sm:$0x3f]
        %v214 = vld [vmem:[%s211] sm:$0xf]
        %v215 = vld [vmem:[%s211 + $0x4] sm:$0xf]
        %v216 = vld [vmem:[%s211 + $0x8] sm:$0xf]
        %v217 = vld [vmem:[%s211 + $0xc] sm:$0xf]
        %v222 = vunpack.c.l.b16 %v214
        %v223 = vunpack.c.l.b16 %v215
        %v224 = vunpack.c.l.b16 %v216
        %v225 = vunpack.c.l.b16 %v217
        %v226 = vpack.c.b16 %v223, %v222
        %v227 = vpack.c.b16 %v225, %v224
        %v229 = vcombine.high %v213, %v213
        %v231 = vunpack.c.l.s4 1983009808
        %v232 = vunpack.c.0.s8 %v231
        %v233 = vlaneseq
        %v234 = vshrl.u32 %v233, 7
        %v235 = vsub.s32 %v232, %v234
        %v236 = vrot.slane %v213, %v235
        %v238 = vunpack.c.l.s4 1983009808
        %v239 = vunpack.c.0.s8 %v238
        %v240 = vlaneseq
        %v241 = vshrl.u32 %v240, 7
        %v242 = vsub.s32 %v239, %v241
        %v243 = vrot.slane %v229, %v242
        %v244 = vcombine.high %v236, %v236
        %vm245 = vcmask 31744
        %v247 = vsel %vm245, %v226, 0
        %v250 = vsel %vm245, %v227, 0
        %vm252 = vcmask 1041408
        %v254 = vsel %vm252, %v236, 0
        %v257 = vsel %vm252, %v244, 0
        %v260 = vsel %vm252, %v243, 0
        %262 = vmatprep.subr.bf16.mxu0 %v257
        %263 = vmatpush1.bf16.msra.mxu0 %v254
        %264 = vmatprep.subr.bf16.mxu0 0
        %265 = vmatpush1.bf16.msra.mxu0 0
        %266 = vmatprep.subr.bf16.mxu0 0
        %267 = vmatpush1.bf16.msra.mxu0 0
        %268 = vmatprep.subr.bf16.mxu0 0
        %269 = vmatpush1.bf16.msra.mxu0 0
        %270 = vmatprep.subr.bf16.mxu0 0
        %271 = vmatpush1.bf16.msra.mxu0 0
        %272 = vmatprep.subr.bf16.mxu0 0
        %273 = vmatpush1.bf16.msra.mxu0 0
        %274 = vmatprep.subr.bf16.mxu0 0
        %275 = vmatpush1.bf16.msra.mxu0 0
        %276 = vmatprep.subr.bf16.mxu0 0
        %277 = vmatpush1.bf16.msra.mxu0 0
        %278 = vmatprep.subr.bf16.mxu0 0
        %279 = vmatpush1.bf16.msra.mxu0 0
        %280 = vmatprep.subr.bf16.mxu0 0
        %281 = vmatpush1.bf16.msra.mxu0 0
        %282 = vmatprep.subr.bf16.mxu0 0
        %283 = vmatpush1.bf16.msra.mxu0 0
        %284 = vmatprep.subr.bf16.mxu0 0
        %285 = vmatpush1.bf16.msra.mxu0 0
        %286 = vmatprep.subr.bf16.mxu0 0
        %287 = vmatpush1.bf16.msra.mxu0 0
        %288 = vmatprep.subr.bf16.mxu0 0
        %289 = vmatpush1.bf16.msra.mxu0 0
        %290 = vmatprep.subr.bf16.mxu0 0
        %291 = vmatpush1.bf16.msra.mxu0 0
        %292 = vmatprep.subr.bf16.mxu0 0
        %293 = vmatpush1.bf16.msra.mxu0 0
        %294 = vmatprep.mubr.bf16.mxu0 0
        %295 = vmatmul.mubr.bf16.gmra.mrb[0].mxu0 %v247
        %v296 = vpop.f32.mrb[0].mxu0
        %v297 = vadd.f32 0.0, %v296
        %v298 = vpop.f32.mrb[0].mxu0
        %v299 = vadd.f32 0.0, %v298
        %v300 = vpop.f32.mrb[0].mxu0
        %v301 = vadd.f32 0.0, %v300
        %v302 = vpop.f32.mrb[0].mxu0
        %v303 = vadd.f32 0.0, %v302
        %304 = vmatprep.mubr.bf16.mxu0 0
        %305 = vmatmul.mubr.bf16.gmra.mrb[0].mxu0 %v250
        %v306 = vpop.f32.mrb[0].mxu0
        %v307 = vadd.f32 0.0, %v306
        %v308 = vpop.f32.mrb[0].mxu0
        %v309 = vadd.f32 0.0, %v308
        %v310 = vpop.f32.mrb[0].mxu0
        %v311 = vadd.f32 0.0, %v310
        %v312 = vpop.f32.mrb[0].mxu0
        %v313 = vadd.f32 0.0, %v312
        %314 = vdwg.mxu0
        %315 = vmatprep.subr.bf16.mxu0 0
        %316 = vmatpush1.bf16.msra.mxu0 %v260
        %317 = vmatprep.subr.bf16.mxu0 0
        %318 = vmatpush1.bf16.msra.mxu0 0
        %319 = vmatprep.subr.bf16.mxu0 0
        %320 = vmatpush1.bf16.msra.mxu0 0
        %321 = vmatprep.subr.bf16.mxu0 0
        %322 = vmatpush1.bf16.msra.mxu0 0
        %323 = vmatprep.subr.bf16.mxu0 0
        %324 = vmatpush1.bf16.msra.mxu0 0
        %325 = vmatprep.subr.bf16.mxu0 0
        %326 = vmatpush1.bf16.msra.mxu0 0
        %327 = vmatprep.subr.bf16.mxu0 0
        %328 = vmatpush1.bf16.msra.mxu0 0
        %329 = vmatprep.subr.bf16.mxu0 0
        %330 = vmatpush1.bf16.msra.mxu0 0
        %331 = vmatprep.subr.bf16.mxu0 0
        %332 = vmatpush1.bf16.msra.mxu0 0
        %333 = vmatprep.subr.bf16.mxu0 0
        %334 = vmatpush1.bf16.msra.mxu0 0
        %335 = vmatprep.subr.bf16.mxu0 0
        %336 = vmatpush1.bf16.msra.mxu0 0
        %337 = vmatprep.subr.bf16.mxu0 0
        %338 = vmatpush1.bf16.msra.mxu0 0
        %339 = vmatprep.subr.bf16.mxu0 0
        %340 = vmatpush1.bf16.msra.mxu0 0
        %341 = vmatprep.subr.bf16.mxu0 0
        %342 = vmatpush1.bf16.msra.mxu0 0
        %343 = vmatprep.subr.bf16.mxu0 0
        %344 = vmatpush1.bf16.msra.mxu0 0
        %345 = vmatprep.subr.bf16.mxu0 0
        %346 = vmatpush1.bf16.msra.mxu0 0
        %347 = vmatprep.mubr.bf16.mxu0 0
        %348 = vmatmul.mubr.bf16.gmra.mrb[0].mxu0 %v247
        %v349 = vpop.f32.mrb[0].mxu0
        %v350 = vadd.f32 0.0, %v349
        %v351 = vpop.f32.mrb[0].mxu0
        %v352 = vpop.f32.mrb[0].mxu0
        %v353 = vadd.f32 0.0, %v352
        %v354 = vpop.f32.mrb[0].mxu0
        %355 = vmatprep.mubr.bf16.mxu0 0
        %356 = vmatmul.mubr.bf16.gmra.mrb[0].mxu0 %v250
        %v357 = vpop.f32.mrb[0].mxu0
        %v358 = vadd.f32 0.0, %v357
        %v359 = vpop.f32.mrb[0].mxu0
        %v360 = vpop.f32.mrb[0].mxu0
        %v361 = vadd.f32 0.0, %v360
        %v362 = vpop.f32.mrb[0].mxu0
        %363 = vdwg.mxu0
        %v364 = vadd.f32 %v297, 0.0
        %v365 = vadd.f32 %v299, 0.0
        %v366 = vadd.f32 %v350, 0.0
        %v367 = vadd.f32 %v364, %v301
        %v368 = vadd.f32 %v365, %v303
        %v369 = vadd.f32 %v366, %v353
        %v370 = vadd.f32 %v367, %v307
        %v371 = vadd.f32 %v368, %v309
        %v372 = vadd.f32 %v369, %v358
        %v373 = vadd.f32 %v370, %v311
        %v374 = vadd.f32 %v371, %v313
        %v375 = vadd.f32 %v372, %v361
        %v376 = vld [vmem:[%s207] sm:$0x3f]
        %s377 = scalar_lea.vmem %s211, 16
        %v378 = vld [vmem:[%s377] sm:$0xf]
        %v379 = vld [vmem:[%s377 + $0x4] sm:$0xf]
        %v380 = vld [vmem:[%s377 + $0x8] sm:$0xf]
        %v381 = vld [vmem:[%s377 + $0xc] sm:$0xf]
        %v386 = vunpack.c.l.b16 %v378
        %v387 = vunpack.c.l.b16 %v379
        %v388 = vunpack.c.l.b16 %v380
        %v389 = vunpack.c.l.b16 %v381
        %v390 = vpack.c.b16 %v387, %v386
        %v391 = vpack.c.b16 %v389, %v388
        %v393 = vcombine.high %v376, %v376
        %v395 = vunpack.c.l.s4 1983009808
        %v396 = vunpack.c.0.s8 %v395
        %v397 = vlaneseq
        %v398 = vshrl.u32 %v397, 7
        %v399 = vsub.s32 %v396, %v398
        %v400 = vrot.slane %v376, %v399
        %v402 = vunpack.c.l.s4 1983009808
        %v403 = vunpack.c.0.s8 %v402
        %v404 = vlaneseq
        %v405 = vshrl.u32 %v404, 7
        %v406 = vsub.s32 %v403, %v405
        %v407 = vrot.slane %v393, %v406
        %v408 = vcombine.high %v400, %v400
        %409 = vrot.lane.b32.xlu0 %v400, 127
        %v410 = vpop.permute.xlu0 %409
        %411 = vrot.lane.b32.xlu0 %v408, 127
        %v412 = vpop.permute.xlu0 %411
        %413 = vrot.lane.b32.xlu0 %v407, 127
        %v414 = vpop.permute.xlu0 %413
        %vm415 = vcmask 1039360
        %v416 = vsel %vm415, %v410, %v412
        %v417 = vsel %vm415, %v412, %v414
        %v419 = vsel %vm245, %v390, 0
        %v422 = vsel %vm245, %v391, 0
        %v425 = vsel %vm252, %v416, 0
        %v428 = vsel %vm252, %v417, 0
        %v431 = vsel %vm252, %v414, 0
        %433 = vmatprep.subr.bf16.mxu0 %v428
        %434 = vmatpush1.bf16.msra.mxu0 %v425
        %435 = vmatprep.subr.bf16.mxu0 0
        %436 = vmatpush1.bf16.msra.mxu0 0
        %437 = vmatprep.subr.bf16.mxu0 0
        %438 = vmatpush1.bf16.msra.mxu0 0
        %439 = vmatprep.subr.bf16.mxu0 0
        %440 = vmatpush1.bf16.msra.mxu0 0
        %441 = vmatprep.subr.bf16.mxu0 0
        %442 = vmatpush1.bf16.msra.mxu0 0
        %443 = vmatprep.subr.bf16.mxu0 0
        %444 = vmatpush1.bf16.msra.mxu0 0
        %445 = vmatprep.subr.bf16.mxu0 0
        %446 = vmatpush1.bf16.msra.mxu0 0
        %447 = vmatprep.subr.bf16.mxu0 0
        %448 = vmatpush1.bf16.msra.mxu0 0
        %449 = vmatprep.subr.bf16.mxu0 0
        %450 = vmatpush1.bf16.msra.mxu0 0
        %451 = vmatprep.subr.bf16.mxu0 0
        %452 = vmatpush1.bf16.msra.mxu0 0
        %453 = vmatprep.subr.bf16.mxu0 0
        %454 = vmatpush1.bf16.msra.mxu0 0
        %455 = vmatprep.subr.bf16.mxu0 0
        %456 = vmatpush1.bf16.msra.mxu0 0
        %457 = vmatprep.subr.bf16.mxu0 0
        %458 = vmatpush1.bf16.msra.mxu0 0
        %459 = vmatprep.subr.bf16.mxu0 0
        %460 = vmatpush1.bf16.msra.mxu0 0
        %461 = vmatprep.subr.bf16.mxu0 0
        %462 = vmatpush1.bf16.msra.mxu0 0
        %463 = vmatprep.subr.bf16.mxu0 0
        %464 = vmatpush1.bf16.msra.mxu0 0
        %465 = vmatprep.mubr.bf16.mxu0 0
        %466 = vmatmul.mubr.bf16.gmra.mrb[0].mxu0 %v419
        %v467 = vpop.f32.mrb[0].mxu0
        %v468 = vadd.f32 0.0, %v467
        %v469 = vpop.f32.mrb[0].mxu0
        %v470 = vadd.f32 0.0, %v469
        %v471 = vpop.f32.mrb[0].mxu0
        %v472 = vadd.f32 0.0, %v471
        %v473 = vpop.f32.mrb[0].mxu0
        %v474 = vadd.f32 0.0, %v473
        %475 = vmatprep.mubr.bf16.mxu0 0
        %476 = vmatmul.mubr.bf16.gmra.mrb[0].mxu0 %v422
        %v477 = vpop.f32.mrb[0].mxu0
        %v478 = vadd.f32 0.0, %v477
        %v479 = vpop.f32.mrb[0].mxu0
        %v480 = vadd.f32 0.0, %v479
        %v481 = vpop.f32.mrb[0].mxu0
        %v482 = vadd.f32 0.0, %v481
        %v483 = vpop.f32.mrb[0].mxu0
        %v484 = vadd.f32 0.0, %v483
        %485 = vdwg.mxu0
        %486 = vmatprep.subr.bf16.mxu0 0
        %487 = vmatpush1.bf16.msra.mxu0 %v431
        %488 = vmatprep.subr.bf16.mxu0 0
        %489 = vmatpush1.bf16.msra.mxu0 0
        %490 = vmatprep.subr.bf16.mxu0 0
        %491 = vmatpush1.bf16.msra.mxu0 0
        %492 = vmatprep.subr.bf16.mxu0 0
        %493 = vmatpush1.bf16.msra.mxu0 0
        %494 = vmatprep.subr.bf16.mxu0 0
        %495 = vmatpush1.bf16.msra.mxu0 0
        %496 = vmatprep.subr.bf16.mxu0 0
        %497 = vmatpush1.bf16.msra.mxu0 0
        %498 = vmatprep.subr.bf16.mxu0 0
        %499 = vmatpush1.bf16.msra.mxu0 0
        %500 = vmatprep.subr.bf16.mxu0 0
        %501 = vmatpush1.bf16.msra.mxu0 0
        %502 = vmatprep.subr.bf16.mxu0 0
        %503 = vmatpush1.bf16.msra.mxu0 0
        %504 = vmatprep.subr.bf16.mxu0 0
        %505 = vmatpush1.bf16.msra.mxu0 0
        %506 = vmatprep.subr.bf16.mxu0 0
        %507 = vmatpush1.bf16.msra.mxu0 0
        %508 = vmatprep.subr.bf16.mxu0 0
        %509 = vmatpush1.bf16.msra.mxu0 0
        %510 = vmatprep.subr.bf16.mxu0 0
        %511 = vmatpush1.bf16.msra.mxu0 0
        %512 = vmatprep.subr.bf16.mxu0 0
        %513 = vmatpush1.bf16.msra.mxu0 0
        %514 = vmatprep.subr.bf16.mxu0 0
        %515 = vmatpush1.bf16.msra.mxu0 0
        %516 = vmatprep.subr.bf16.mxu0 0
        %517 = vmatpush1.bf16.msra.mxu0 0
        %518 = vmatprep.mubr.bf16.mxu0 0
        %519 = vmatmul.mubr.bf16.gmra.mrb[0].mxu0 %v419
        %v520 = vpop.f32.mrb[0].mxu0
        %v521 = vadd.f32 0.0, %v520
        %v522 = vpop.f32.mrb[0].mxu0
        %v523 = vpop.f32.mrb[0].mxu0
        %v524 = vadd.f32 0.0, %v523
        %v525 = vpop.f32.mrb[0].mxu0
        %526 = vmatprep.mubr.bf16.mxu0 0
        %527 = vmatmul.mubr.bf16.gmra.mrb[0].mxu0 %v422
        %v528 = vpop.f32.mrb[0].mxu0
        %v529 = vadd.f32 0.0, %v528
        %v530 = vpop.f32.mrb[0].mxu0
        %v531 = vpop.f32.mrb[0].mxu0
        %v532 = vadd.f32 0.0, %v531
        %v533 = vpop.f32.mrb[0].mxu0
        %534 = vdwg.mxu0
        %v535 = vadd.f32 %v373, %v468
        %v536 = vadd.f32 %v374, %v470
        %v537 = vadd.f32 %v375, %v521
        %v538 = vadd.f32 %v535, %v472
        %v539 = vadd.f32 %v536, %v474
        %v540 = vadd.f32 %v537, %v524
        %v541 = vadd.f32 %v538, %v478
        %v542 = vadd.f32 %v539, %v480
        %v543 = vadd.f32 %v540, %v529
        %v544 = vadd.f32 %v541, %v482
        %v545 = vadd.f32 %v542, %v484
        %v546 = vadd.f32 %v543, %v532
        %v547 = vld [vmem:[%s207] sm:$0x3f]
        %s548 = scalar_lea.vmem %s211, 32
        %v549 = vld [vmem:[%s548] sm:$0xf]
        %v550 = vld [vmem:[%s548 + $0x4] sm:$0xf]
        %v551 = vld [vmem:[%s548 + $0x8] sm:$0xf]
        %v552 = vld [vmem:[%s548 + $0xc] sm:$0xf]
        %v557 = vunpack.c.l.b16 %v549
        %v558 = vunpack.c.l.b16 %v550
        %v559 = vunpack.c.l.b16 %v551
        %v560 = vunpack.c.l.b16 %v552
        %v561 = vpack.c.b16 %v558, %v557
        %v562 = vpack.c.b16 %v560, %v559
        %v564 = vcombine.high %v547, %v547
        %v566 = vunpack.c.l.s4 1983009808
        %v567 = vunpack.c.0.s8 %v566
        %v568 = vlaneseq
        %v569 = vshrl.u32 %v568, 7
        %v570 = vsub.s32 %v567, %v569
        %v571 = vrot.slane %v547, %v570
        %v573 = vunpack.c.l.s4 1983009808
        %v574 = vunpack.c.0.s8 %v573
        %v575 = vlaneseq
        %v576 = vshrl.u32 %v575, 7
        %v577 = vsub.s32 %v574, %v576
        %v578 = vrot.slane %v564, %v577
        %v579 = vcombine.high %v571, %v571
        %580 = vrot.lane.b32.xlu0 %v571, 126
        %v581 = vpop.permute.xlu0 %580
        %582 = vrot.lane.b32.xlu0 %v579, 126
        %v583 = vpop.permute.xlu0 %582
        %584 = vrot.lane.b32.xlu0 %v578, 126
        %v585 = vpop.permute.xlu0 %584
        %vm586 = vcmask 1031168
        %v587 = vsel %vm586, %v581, %v583
        %v588 = vsel %vm586, %v583, %v585
        %v590 = vsel %vm245, %v561, 0
        %v593 = vsel %vm245, %v562, 0
        %v596 = vsel %vm252, %v587, 0
        %v599 = vsel %vm252, %v588, 0
        %v602 = vsel %vm252, %v585, 0
        %604 = vmatprep.subr.bf16.mxu0 %v599
        %605 = vmatpush1.bf16.msra.mxu0 %v596
        %606 = vmatprep.subr.bf16.mxu0 0
        %607 = vmatpush1.bf16.msra.mxu0 0
        %608 = vmatprep.subr.bf16.mxu0 0
        %609 = vmatpush1.bf16.msra.mxu0 0
        %610 = vmatprep.subr.bf16.mxu0 0
        %611 = vmatpush1.bf16.msra.mxu0 0
        %612 = vmatprep.subr.bf16.mxu0 0
        %613 = vmatpush1.bf16.msra.mxu0 0
        %614 = vmatprep.subr.bf16.mxu0 0
        %615 = vmatpush1.bf16.msra.mxu0 0
        %616 = vmatprep.subr.bf16.mxu0 0
        %617 = vmatpush1.bf16.msra.mxu0 0
        %618 = vmatprep.subr.bf16.mxu0 0
        %619 = vmatpush1.bf16.msra.mxu0 0
        %620 = vmatprep.subr.bf16.mxu0 0
        %621 = vmatpush1.bf16.msra.mxu0 0
        %622 = vmatprep.subr.bf16.mxu0 0
        %623 = vmatpush1.bf16.msra.mxu0 0
        %624 = vmatprep.subr.bf16.mxu0 0
        %625 = vmatpush1.bf16.msra.mxu0 0
        %626 = vmatprep.subr.bf16.mxu0 0
        %627 = vmatpush1.bf16.msra.mxu0 0
        %628 = vmatprep.subr.bf16.mxu0 0
        %629 = vmatpush1.bf16.msra.mxu0 0
        %630 = vmatprep.subr.bf16.mxu0 0
        %631 = vmatpush1.bf16.msra.mxu0 0
        %632 = vmatprep.subr.bf16.mxu0 0
        %633 = vmatpush1.bf16.msra.mxu0 0
        %634 = vmatprep.subr.bf16.mxu0 0
        %635 = vmatpush1.bf16.msra.mxu0 0
        %636 = vmatprep.mubr.bf16.mxu0 0
        %637 = vmatmul.mubr.bf16.gmra.mrb[0].mxu0 %v590
        %v638 = vpop.f32.mrb[0].mxu0
        %v639 = vadd.f32 0.0, %v638
        %v640 = vpop.f32.mrb[0].mxu0
        %v641 = vadd.f32 0.0, %v640
        %v642 = vpop.f32.mrb[0].mxu0
        %v643 = vadd.f32 0.0, %v642
        %v644 = vpop.f32.mrb[0].mxu0
        %v645 = vadd.f32 0.0, %v644
        %646 = vmatprep.mubr.bf16.mxu0 0
        %647 = vmatmul.mubr.bf16.gmra.mrb[0].mxu0 %v593
        %v648 = vpop.f32.mrb[0].mxu0
        %v649 = vadd.f32 0.0, %v648
        %v650 = vpop.f32.mrb[0].mxu0
        %v651 = vadd.f32 0.0, %v650
        %v652 = vpop.f32.mrb[0].mxu0
        %v653 = vadd.f32 0.0, %v652
        %v654 = vpop.f32.mrb[0].mxu0
        %v655 = vadd.f32 0.0, %v654
        %656 = vdwg.mxu0
        %657 = vmatprep.subr.bf16.mxu0 0
        %658 = vmatpush1.bf16.msra.mxu0 %v602
        %659 = vmatprep.subr.bf16.mxu0 0
        %660 = vmatpush1.bf16.msra.mxu0 0
        %661 = vmatprep.subr.bf16.mxu0 0
        %662 = vmatpush1.bf16.msra.mxu0 0
        %663 = vmatprep.subr.bf16.mxu0 0
        %664 = vmatpush1.bf16.msra.mxu0 0
        %665 = vmatprep.subr.bf16.mxu0 0
        %666 = vmatpush1.bf16.msra.mxu0 0
        %667 = vmatprep.subr.bf16.mxu0 0
        %668 = vmatpush1.bf16.msra.mxu0 0
        %669 = vmatprep.subr.bf16.mxu0 0
        %670 = vmatpush1.bf16.msra.mxu0 0
        %671 = vmatprep.subr.bf16.mxu0 0
        %672 = vmatpush1.bf16.msra.mxu0 0
        %673 = vmatprep.subr.bf16.mxu0 0
        %674 = vmatpush1.bf16.msra.mxu0 0
        %675 = vmatprep.subr.bf16.mxu0 0
        %676 = vmatpush1.bf16.msra.mxu0 0
        %677 = vmatprep.subr.bf16.mxu0 0
        %678 = vmatpush1.bf16.msra.mxu0 0
        %679 = vmatprep.subr.bf16.mxu0 0
        %680 = vmatpush1.bf16.msra.mxu0 0
        %681 = vmatprep.subr.bf16.mxu0 0
        %682 = vmatpush1.bf16.msra.mxu0 0
        %683 = vmatprep.subr.bf16.mxu0 0
        %684 = vmatpush1.bf16.msra.mxu0 0
        %685 = vmatprep.subr.bf16.mxu0 0
        %686 = vmatpush1.bf16.msra.mxu0 0
        %687 = vmatprep.subr.bf16.mxu0 0
        %688 = vmatpush1.bf16.msra.mxu0 0
        %689 = vmatprep.mubr.bf16.mxu0 0
        %690 = vmatmul.mubr.bf16.gmra.mrb[0].mxu0 %v590
        %v691 = vpop.f32.mrb[0].mxu0
        %v692 = vadd.f32 0.0, %v691
        %v693 = vpop.f32.mrb[0].mxu0
        %v694 = vpop.f32.mrb[0].mxu0
        %v695 = vadd.f32 0.0, %v694
        %v696 = vpop.f32.mrb[0].mxu0
        %697 = vmatprep.mubr.bf16.mxu0 0
        %698 = vmatmul.mubr.bf16.gmra.mrb[0].mxu0 %v593
        %v699 = vpop.f32.mrb[0].mxu0
        %v700 = vadd.f32 0.0, %v699
        %v701 = vpop.f32.mrb[0].mxu0
        %v702 = vpop.f32.mrb[0].mxu0
        %v703 = vadd.f32 0.0, %v702
        %v704 = vpop.f32.mrb[0].mxu0
        %705 = vdwg.mxu0
        %v706 = vadd.f32 %v544, %v639
        %v707 = vadd.f32 %v545, %v641
        %v708 = vadd.f32 %v546, %v692
        %v709 = vadd.f32 %v706, %v643
        %v710 = vadd.f32 %v707, %v645
        %v711 = vadd.f32 %v708, %v695
        %v712 = vadd.f32 %v709, %v649
        %v713 = vadd.f32 %v710, %v651
        %v714 = vadd.f32 %v711, %v700
        %v715 = vadd.f32 %v712, %v653
        %v716 = vadd.f32 %v713, %v655
        %v717 = vadd.f32 %v714, %v703
        %v718 = vld [vmem:[%s207] sm:$0x3f]
        %s719 = scalar_lea.vmem %s211, 48
        %v720 = vld [vmem:[%s719] sm:$0xf]
        %v721 = vld [vmem:[%s719 + $0x4] sm:$0xf]
        %v722 = vld [vmem:[%s719 + $0x8] sm:$0xf]
        %v723 = vld [vmem:[%s719 + $0xc] sm:$0xf]
        %v728 = vunpack.c.l.b16 %v720
        %v729 = vunpack.c.l.b16 %v721
        %v730 = vunpack.c.l.b16 %v722
        %v731 = vunpack.c.l.b16 %v723
        %v732 = vpack.c.b16 %v729, %v728
        %v733 = vpack.c.b16 %v731, %v730
        %v735 = vcombine.high %v718, %v718
        %v737 = vunpack.c.l.s4 1983009808
        %v738 = vunpack.c.0.s8 %v737
        %v739 = vlaneseq
        %v740 = vshrl.u32 %v739, 7
        %v741 = vsub.s32 %v738, %v740
        %v742 = vrot.slane %v718, %v741
        %v744 = vunpack.c.l.s4 1983009808
        %v745 = vunpack.c.0.s8 %v744
        %v746 = vlaneseq
        %v747 = vshrl.u32 %v746, 7
        %v748 = vsub.s32 %v745, %v747
        %v749 = vrot.slane %v735, %v748
        %v750 = vcombine.high %v742, %v742
        %751 = vrot.lane.b32.xlu0 %v742, 110
        %v752 = vpop.permute.xlu0 %751
        %753 = vrot.lane.b32.xlu0 %v750, 110
        %v754 = vpop.permute.xlu0 %753
        %755 = vrot.lane.b32.xlu0 %v749, 110
        %v756 = vpop.permute.xlu0 %755
        %vm757 = vcmask 900096
        %v758 = vsel %vm757, %v752, %v754
        %v759 = vsel %vm757, %v754, %v756
        %v761 = vsel %vm245, %v732, 0
        %v764 = vsel %vm245, %v733, 0
        %v767 = vsel %vm252, %v758, 0
        %v770 = vsel %vm252, %v759, 0
        %v773 = vsel %vm252, %v756, 0
        %775 = vmatprep.subr.bf16.mxu0 %v770
        %776 = vmatpush1.bf16.msra.mxu0 %v767
        %777 = vmatprep.subr.bf16.mxu0 0
        %778 = vmatpush1.bf16.msra.mxu0 0
        %779 = vmatprep.subr.bf16.mxu0 0
        %780 = vmatpush1.bf16.msra.mxu0 0
        %781 = vmatprep.subr.bf16.mxu0 0
        %782 = vmatpush1.bf16.msra.mxu0 0
        %783 = vmatprep.subr.bf16.mxu0 0
        %784 = vmatpush1.bf16.msra.mxu0 0
        %785 = vmatprep.subr.bf16.mxu0 0
        %786 = vmatpush1.bf16.msra.mxu0 0
        %787 = vmatprep.subr.bf16.mxu0 0
        %788 = vmatpush1.bf16.msra.mxu0 0
        %789 = vmatprep.subr.bf16.mxu0 0
        %790 = vmatpush1.bf16.msra.mxu0 0
        %791 = vmatprep.subr.bf16.mxu0 0
        %792 = vmatpush1.bf16.msra.mxu0 0
        %793 = vmatprep.subr.bf16.mxu0 0
        %794 = vmatpush1.bf16.msra.mxu0 0
        %795 = vmatprep.subr.bf16.mxu0 0
        %796 = vmatpush1.bf16.msra.mxu0 0
        %797 = vmatprep.subr.bf16.mxu0 0
        %798 = vmatpush1.bf16.msra.mxu0 0
        %799 = vmatprep.subr.bf16.mxu0 0
        %800 = vmatpush1.bf16.msra.mxu0 0
        %801 = vmatprep.subr.bf16.mxu0 0
        %802 = vmatpush1.bf16.msra.mxu0 0
        %803 = vmatprep.subr.bf16.mxu0 0
        %804 = vmatpush1.bf16.msra.mxu0 0
        %805 = vmatprep.subr.bf16.mxu0 0
        %806 = vmatpush1.bf16.msra.mxu0 0
        %807 = vmatprep.mubr.bf16.mxu0 0
        %808 = vmatmul.mubr.bf16.gmra.mrb[0].mxu0 %v761
        %v809 = vpop.f32.mrb[0].mxu0
        %v810 = vadd.f32 0.0, %v809
        %v811 = vpop.f32.mrb[0].mxu0
        %v812 = vadd.f32 0.0, %v811
        %v813 = vpop.f32.mrb[0].mxu0
        %v814 = vadd.f32 0.0, %v813
        %v815 = vpop.f32.mrb[0].mxu0
        %v816 = vadd.f32 0.0, %v815
        %817 = vmatprep.mubr.bf16.mxu0 0
        %818 = vmatmul.mubr.bf16.gmra.mrb[0].mxu0 %v764
        %v819 = vpop.f32.mrb[0].mxu0
        %v820 = vadd.f32 0.0, %v819
        %v821 = vpop.f32.mrb[0].mxu0
        %v822 = vadd.f32 0.0, %v821
        %v823 = vpop.f32.mrb[0].mxu0
        %v824 = vadd.f32 0.0, %v823
        %v825 = vpop.f32.mrb[0].mxu0
        %v826 = vadd.f32 0.0, %v825
        %827 = vdwg.mxu0
        %828 = vmatprep.subr.bf16.mxu0 0
        %829 = vmatpush1.bf16.msra.mxu0 %v773
        %830 = vmatprep.subr.bf16.mxu0 0
        %831 = vmatpush1.bf16.msra.mxu0 0
        %832 = vmatprep.subr.bf16.mxu0 0
        %833 = vmatpush1.bf16.msra.mxu0 0
        %834 = vmatprep.subr.bf16.mxu0 0
        %835 = vmatpush1.bf16.msra.mxu0 0
        %836 = vmatprep.subr.bf16.mxu0 0
        %837 = vmatpush1.bf16.msra.mxu0 0
        %838 = vmatprep.subr.bf16.mxu0 0
        %839 = vmatpush1.bf16.msra.mxu0 0
        %840 = vmatprep.subr.bf16.mxu0 0
        %841 = vmatpush1.bf16.msra.mxu0 0
        %842 = vmatprep.subr.bf16.mxu0 0
        %843 = vmatpush1.bf16.msra.mxu0 0
        %844 = vmatprep.subr.bf16.mxu0 0
        %845 = vmatpush1.bf16.msra.mxu0 0
        %846 = vmatprep.subr.bf16.mxu0 0
        %847 = vmatpush1.bf16.msra.mxu0 0
        %848 = vmatprep.subr.bf16.mxu0 0
        %849 = vmatpush1.bf16.msra.mxu0 0
        %850 = vmatprep.subr.bf16.mxu0 0
        %851 = vmatpush1.bf16.msra.mxu0 0
        %852 = vmatprep.subr.bf16.mxu0 0
        %853 = vmatpush1.bf16.msra.mxu0 0
        %854 = vmatprep.subr.bf16.mxu0 0
        %855 = vmatpush1.bf16.msra.mxu0 0
        %856 = vmatprep.subr.bf16.mxu0 0
        %857 = vmatpush1.bf16.msra.mxu0 0
        %858 = vmatprep.subr.bf16.mxu0 0
        %859 = vmatpush1.bf16.msra.mxu0 0
        %860 = vmatprep.mubr.bf16.mxu0 0
        %861 = vmatmul.mubr.bf16.gmra.mrb[0].mxu0 %v761
        %v862 = vpop.f32.mrb[0].mxu0
        %v863 = vadd.f32 0.0, %v862
        %v864 = vpop.f32.mrb[0].mxu0
        %v865 = vpop.f32.mrb[0].mxu0
        %v866 = vadd.f32 0.0, %v865
        %v867 = vpop.f32.mrb[0].mxu0
        %868 = vmatprep.mubr.bf16.mxu0 0
        %869 = vmatmul.mubr.bf16.gmra.mrb[0].mxu0 %v764
        %v870 = vpop.f32.mrb[0].mxu0
        %v871 = vadd.f32 0.0, %v870
        %v872 = vpop.f32.mrb[0].mxu0
        %v873 = vpop.f32.mrb[0].mxu0
        %v874 = vadd.f32 0.0, %v873
        %v875 = vpop.f32.mrb[0].mxu0
        %876 = vdwg.mxu0
        %v877 = vadd.f32 %v715, %v810
        %v878 = vadd.f32 %v716, %v812
        %v879 = vadd.f32 %v717, %v863
        %v880 = vadd.f32 %v877, %v814
        %v881 = vadd.f32 %v878, %v816
        %v882 = vadd.f32 %v879, %v866
        %v883 = vadd.f32 %v880, %v820
        %v884 = vadd.f32 %v881, %v822
        %v885 = vadd.f32 %v882, %v871
        %v886 = vadd.f32 %v883, %v824
        %v887 = vadd.f32 %v884, %v826
        %v888 = vadd.f32 %v885, %v874
        %v889 = vld [vmem:[%s207] sm:$0x3f]
        %s890 = scalar_lea.vmem %s211, 64
        %v891 = vld [vmem:[%s890] sm:$0xf]
        %v892 = vld [vmem:[%s890 + $0x4] sm:$0xf]
        %v893 = vld [vmem:[%s890 + $0x8] sm:$0xf]
        %v894 = vld [vmem:[%s890 + $0xc] sm:$0xf]
        %v899 = vunpack.c.l.b16 %v891
        %v900 = vunpack.c.l.b16 %v892
        %v901 = vunpack.c.l.b16 %v893
        %v902 = vunpack.c.l.b16 %v894
        %v903 = vpack.c.b16 %v900, %v899
        %v904 = vpack.c.b16 %v902, %v901
        %v906 = vcombine.high %v889, %v889
        %v908 = vunpack.c.l.s4 1983009808
        %v909 = vunpack.c.0.s8 %v908
        %v910 = vlaneseq
        %v911 = vshrl.u32 %v910, 7
        %v912 = vsub.s32 %v909, %v911
        %v913 = vrot.slane %v889, %v912
        %v915 = vunpack.c.l.s4 1983009808
        %v916 = vunpack.c.0.s8 %v915
        %v917 = vlaneseq
        %v918 = vshrl.u32 %v917, 7
        %v919 = vsub.s32 %v916, %v918
        %v920 = vrot.slane %v906, %v919
        %v921 = vcombine.high %v913, %v913
        %922 = vrot.lane.b32.xlu0 %v913, 109
        %v923 = vpop.permute.xlu0 %922
        %924 = vrot.lane.b32.xlu0 %v921, 109
        %v925 = vpop.permute.xlu0 %924
        %926 = vrot.lane.b32.xlu0 %v920, 109
        %v927 = vpop.permute.xlu0 %926
        %vm928 = vcmask 891904
        %v929 = vsel %vm928, %v923, %v925
        %v930 = vsel %vm928, %v925, %v927
        %v932 = vsel %vm245, %v903, 0
        %v935 = vsel %vm245, %v904, 0
        %v938 = vsel %vm252, %v929, 0
        %v941 = vsel %vm252, %v930, 0
        %v944 = vsel %vm252, %v927, 0
        %946 = vmatprep.subr.bf16.mxu0 %v941
        %947 = vmatpush1.bf16.msra.mxu0 %v938
        %948 = vmatprep.subr.bf16.mxu0 0
        %949 = vmatpush1.bf16.msra.mxu0 0
        %950 = vmatprep.subr.bf16.mxu0 0
        %951 = vmatpush1.bf16.msra.mxu0 0
        %952 = vmatprep.subr.bf16.mxu0 0
        %953 = vmatpush1.bf16.msra.mxu0 0
        %954 = vmatprep.subr.bf16.mxu0 0
        %955 = vmatpush1.bf16.msra.mxu0 0
        %956 = vmatprep.subr.bf16.mxu0 0
        %957 = vmatpush1.bf16.msra.mxu0 0
        %958 = vmatprep.subr.bf16.mxu0 0
        %959 = vmatpush1.bf16.msra.mxu0 0
        %960 = vmatprep.subr.bf16.mxu0 0
        %961 = vmatpush1.bf16.msra.mxu0 0
        %962 = vmatprep.subr.bf16.mxu0 0
        %963 = vmatpush1.bf16.msra.mxu0 0
        %964 = vmatprep.subr.bf16.mxu0 0
        %965 = vmatpush1.bf16.msra.mxu0 0
        %966 = vmatprep.subr.bf16.mxu0 0
        %967 = vmatpush1.bf16.msra.mxu0 0
        %968 = vmatprep.subr.bf16.mxu0 0
        %969 = vmatpush1.bf16.msra.mxu0 0
        %970 = vmatprep.subr.bf16.mxu0 0
        %971 = vmatpush1.bf16.msra.mxu0 0
        %972 = vmatprep.subr.bf16.mxu0 0
        %973 = vmatpush1.bf16.msra.mxu0 0
        %974 = vmatprep.subr.bf16.mxu0 0
        %975 = vmatpush1.bf16.msra.mxu0 0
        %976 = vmatprep.subr.bf16.mxu0 0
        %977 = vmatpush1.bf16.msra.mxu0 0
        %978 = vmatprep.mubr.bf16.mxu0 0
        %979 = vmatmul.mubr.bf16.gmra.mrb[0].mxu0 %v932
        %v980 = vpop.f32.mrb[0].mxu0
        %v981 = vadd.f32 0.0, %v980
        %v982 = vpop.f32.mrb[0].mxu0
        %v983 = vadd.f32 0.0, %v982
        %v984 = vpop.f32.mrb[0].mxu0
        %v985 = vadd.f32 0.0, %v984
        %v986 = vpop.f32.mrb[0].mxu0
        %v987 = vadd.f32 0.0, %v986
        %988 = vmatprep.mubr.bf16.mxu0 0
        %989 = vmatmul.mubr.bf16.gmra.mrb[0].mxu0 %v935
        %v990 = vpop.f32.mrb[0].mxu0
        %v991 = vadd.f32 0.0, %v990
        %v992 = vpop.f32.mrb[0].mxu0
        %v993 = vadd.f32 0.0, %v992
        %v994 = vpop.f32.mrb[0].mxu0
        %v995 = vadd.f32 0.0, %v994
        %v996 = vpop.f32.mrb[0].mxu0
        %v997 = vadd.f32 0.0, %v996
        %998 = vdwg.mxu0
        %999 = vmatprep.subr.bf16.mxu0 0
        %1000 = vmatpush1.bf16.msra.mxu0 %v944
        %1001 = vmatprep.subr.bf16.mxu0 0
        %1002 = vmatpush1.bf16.msra.mxu0 0
        %1003 = vmatprep.subr.bf16.mxu0 0
        %1004 = vmatpush1.bf16.msra.mxu0 0
        %1005 = vmatprep.subr.bf16.mxu0 0
        %1006 = vmatpush1.bf16.msra.mxu0 0
        %1007 = vmatprep.subr.bf16.mxu0 0
        %1008 = vmatpush1.bf16.msra.mxu0 0
        %1009 = vmatprep.subr.bf16.mxu0 0
        %1010 = vmatpush1.bf16.msra.mxu0 0
        %1011 = vmatprep.subr.bf16.mxu0 0
        %1012 = vmatpush1.bf16.msra.mxu0 0
        %1013 = vmatprep.subr.bf16.mxu0 0
        %1014 = vmatpush1.bf16.msra.mxu0 0
        %1015 = vmatprep.subr.bf16.mxu0 0
        %1016 = vmatpush1.bf16.msra.mxu0 0
        %1017 = vmatprep.subr.bf16.mxu0 0
        %1018 = vmatpush1.bf16.msra.mxu0 0
        %1019 = vmatprep.subr.bf16.mxu0 0
        %1020 = vmatpush1.bf16.msra.mxu0 0
        %1021 = vmatprep.subr.bf16.mxu0 0
        %1022 = vmatpush1.bf16.msra.mxu0 0
        %1023 = vmatprep.subr.bf16.mxu0 0
        %1024 = vmatpush1.bf16.msra.mxu0 0
        %1025 = vmatprep.subr.bf16.mxu0 0
        %1026 = vmatpush1.bf16.msra.mxu0 0
        %1027 = vmatprep.subr.bf16.mxu0 0
        %1028 = vmatpush1.bf16.msra.mxu0 0
        %1029 = vmatprep.subr.bf16.mxu0 0
        %1030 = vmatpush1.bf16.msra.mxu0 0
        %1031 = vmatprep.mubr.bf16.mxu0 0
        %1032 = vmatmul.mubr.bf16.gmra.mrb[0].mxu0 %v932
        %v1033 = vpop.f32.mrb[0].mxu0
        %v1034 = vadd.f32 0.0, %v1033
        %v1035 = vpop.f32.mrb[0].mxu0
        %v1036 = vpop.f32.mrb[0].mxu0
        %v1037 = vadd.f32 0.0, %v1036
        %v1038 = vpop.f32.mrb[0].mxu0
        %1039 = vmatprep.mubr.bf16.mxu0 0
        %1040 = vmatmul.mubr.bf16.gmra.mrb[0].mxu0 %v935
        %v1041 = vpop.f32.mrb[0].mxu0
        %v1042 = vadd.f32 0.0, %v1041
        %v1043 = vpop.f32.mrb[0].mxu0
        %v1044 = vpop.f32.mrb[0].mxu0
        %v1045 = vadd.f32 0.0, %v1044
        %v1046 = vpop.f32.mrb[0].mxu0
        %1047 = vdwg.mxu0
        %v1048 = vadd.f32 %v886, %v981
        %v1049 = vadd.f32 %v887, %v983
        %v1050 = vadd.f32 %v888, %v1034
        %v1051 = vadd.f32 %v1048, %v985
        %v1052 = vadd.f32 %v1049, %v987
        %v1053 = vadd.f32 %v1050, %v1037
        %v1054 = vadd.f32 %v1051, %v991
        %v1055 = vadd.f32 %v1052, %v993
        %v1056 = vadd.f32 %v1053, %v1042
        %v1057 = vadd.f32 %v1054, %v995
        %v1058 = vadd.f32 %v1055, %v997
        %v1059 = vadd.f32 %v1056, %v1045
        %v1060 = vld [vmem:[%s207] sm:$0x3f]
        %s1061 = scalar_lea.vmem %s211, 80
        %v1062 = vld [vmem:[%s1061] sm:$0xf]
        %v1063 = vld [vmem:[%s1061 + $0x4] sm:$0xf]
        %v1064 = vld [vmem:[%s1061 + $0x8] sm:$0xf]
        %v1065 = vld [vmem:[%s1061 + $0xc] sm:$0xf]
        %v1070 = vunpack.c.l.b16 %v1062
        %v1071 = vunpack.c.l.b16 %v1063
        %v1072 = vunpack.c.l.b16 %v1064
        %v1073 = vunpack.c.l.b16 %v1065
        %v1074 = vpack.c.b16 %v1071, %v1070
        %v1075 = vpack.c.b16 %v1073, %v1072
        %v1077 = vcombine.high %v1060, %v1060
        %v1079 = vunpack.c.l.s4 1983009808
        %v1080 = vunpack.c.0.s8 %v1079
        %v1081 = vlaneseq
        %v1082 = vshrl.u32 %v1081, 7
        %v1083 = vsub.s32 %v1080, %v1082
        %v1084 = vrot.slane %v1060, %v1083
        %v1086 = vunpack.c.l.s4 1983009808
        %v1087 = vunpack.c.0.s8 %v1086
        %v1088 = vlaneseq
        %v1089 = vshrl.u32 %v1088, 7
        %v1090 = vsub.s32 %v1087, %v1089
        %v1091 = vrot.slane %v1077, %v1090
        %v1092 = vcombine.high %v1084, %v1084
        %1093 = vrot.lane.b32.xlu0 %v1084, 108
        %v1094 = vpop.permute.xlu0 %1093
        %1095 = vrot.lane.b32.xlu0 %v1092, 108
        %v1096 = vpop.permute.xlu0 %1095
        %1097 = vrot.lane.b32.xlu0 %v1091, 108
        %v1098 = vpop.permute.xlu0 %1097
        %vm1099 = vcmask 883712
        %v1100 = vsel %vm1099, %v1094, %v1096
        %v1101 = vsel %vm1099, %v1096, %v1098
        %v1103 = vsel %vm245, %v1074, 0
        %v1106 = vsel %vm245, %v1075, 0
        %v1109 = vsel %vm252, %v1100, 0
        %v1112 = vsel %vm252, %v1101, 0
        %v1115 = vsel %vm252, %v1098, 0
        %1117 = vmatprep.subr.bf16.mxu0 %v1112
        %1118 = vmatpush1.bf16.msra.mxu0 %v1109
        %1119 = vmatprep.subr.bf16.mxu0 0
        %1120 = vmatpush1.bf16.msra.mxu0 0
        %1121 = vmatprep.subr.bf16.mxu0 0
        %1122 = vmatpush1.bf16.msra.mxu0 0
        %1123 = vmatprep.subr.bf16.mxu0 0
        %1124 = vmatpush1.bf16.msra.mxu0 0
        %1125 = vmatprep.subr.bf16.mxu0 0
        %1126 = vmatpush1.bf16.msra.mxu0 0
        %1127 = vmatprep.subr.bf16.mxu0 0
        %1128 = vmatpush1.bf16.msra.mxu0 0
        %1129 = vmatprep.subr.bf16.mxu0 0
        %1130 = vmatpush1.bf16.msra.mxu0 0
        %1131 = vmatprep.subr.bf16.mxu0 0
        %1132 = vmatpush1.bf16.msra.mxu0 0
        %1133 = vmatprep.subr.bf16.mxu0 0
        %1134 = vmatpush1.bf16.msra.mxu0 0
        %1135 = vmatprep.subr.bf16.mxu0 0
        %1136 = vmatpush1.bf16.msra.mxu0 0
        %1137 = vmatprep.subr.bf16.mxu0 0
        %1138 = vmatpush1.bf16.msra.mxu0 0
        %1139 = vmatprep.subr.bf16.mxu0 0
        %1140 = vmatpush1.bf16.msra.mxu0 0
        %1141 = vmatprep.subr.bf16.mxu0 0
        %1142 = vmatpush1.bf16.msra.mxu0 0
        %1143 = vmatprep.subr.bf16.mxu0 0
        %1144 = vmatpush1.bf16.msra.mxu0 0
        %1145 = vmatprep.subr.bf16.mxu0 0
        %1146 = vmatpush1.bf16.msra.mxu0 0
        %1147 = vmatprep.subr.bf16.mxu0 0
        %1148 = vmatpush1.bf16.msra.mxu0 0
        %1149 = vmatprep.mubr.bf16.mxu0 0
        %1150 = vmatmul.mubr.bf16.gmra.mrb[0].mxu0 %v1103
        %v1151 = vpop.f32.mrb[0].mxu0
        %v1152 = vadd.f32 0.0, %v1151
        %v1153 = vpop.f32.mrb[0].mxu0
        %v1154 = vadd.f32 0.0, %v1153
        %v1155 = vpop.f32.mrb[0].mxu0
        %v1156 = vadd.f32 0.0, %v1155
        %v1157 = vpop.f32.mrb[0].mxu0
        %v1158 = vadd.f32 0.0, %v1157
        %1159 = vmatprep.mubr.bf16.mxu0 0
        %1160 = vmatmul.mubr.bf16.gmra.mrb[0].mxu0 %v1106
        %v1161 = vpop.f32.mrb[0].mxu0
        %v1162 = vadd.f32 0.0, %v1161
        %v1163 = vpop.f32.mrb[0].mxu0
        %v1164 = vadd.f32 0.0, %v1163
        %v1165 = vpop.f32.mrb[0].mxu0
        %v1166 = vadd.f32 0.0, %v1165
        %v1167 = vpop.f32.mrb[0].mxu0
        %v1168 = vadd.f32 0.0, %v1167
        %1169 = vdwg.mxu0
        %1170 = vmatprep.subr.bf16.mxu0 0
        %1171 = vmatpush1.bf16.msra.mxu0 %v1115
        %1172 = vmatprep.subr.bf16.mxu0 0
        %1173 = vmatpush1.bf16.msra.mxu0 0
        %1174 = vmatprep.subr.bf16.mxu0 0
        %1175 = vmatpush1.bf16.msra.mxu0 0
        %1176 = vmatprep.subr.bf16.mxu0 0
        %1177 = vmatpush1.bf16.msra.mxu0 0
        %1178 = vmatprep.subr.bf16.mxu0 0
        %1179 = vmatpush1.bf16.msra.mxu0 0
        %1180 = vmatprep.subr.bf16.mxu0 0
        %1181 = vmatpush1.bf16.msra.mxu0 0
        %1182 = vmatprep.subr.bf16.mxu0 0
        %1183 = vmatpush1.bf16.msra.mxu0 0
        %1184 = vmatprep.subr.bf16.mxu0 0
        %1185 = vmatpush1.bf16.msra.mxu0 0
        %1186 = vmatprep.subr.bf16.mxu0 0
        %1187 = vmatpush1.bf16.msra.mxu0 0
        %1188 = vmatprep.subr.bf16.mxu0 0
        %1189 = vmatpush1.bf16.msra.mxu0 0
        %1190 = vmatprep.subr.bf16.mxu0 0
        %1191 = vmatpush1.bf16.msra.mxu0 0
        %1192 = vmatprep.subr.bf16.mxu0 0
        %1193 = vmatpush1.bf16.msra.mxu0 0
        %1194 = vmatprep.subr.bf16.mxu0 0
        %1195 = vmatpush1.bf16.msra.mxu0 0
        %1196 = vmatprep.subr.bf16.mxu0 0
        %1197 = vmatpush1.bf16.msra.mxu0 0
        %1198 = vmatprep.subr.bf16.mxu0 0
        %1199 = vmatpush1.bf16.msra.mxu0 0
        %1200 = vmatprep.subr.bf16.mxu0 0
        %1201 = vmatpush1.bf16.msra.mxu0 0
        %1202 = vmatprep.mubr.bf16.mxu0 0
        %1203 = vmatmul.mubr.bf16.gmra.mrb[0].mxu0 %v1103
        %v1204 = vpop.f32.mrb[0].mxu0
        %v1205 = vadd.f32 0.0, %v1204
        %v1206 = vpop.f32.mrb[0].mxu0
        %v1207 = vpop.f32.mrb[0].mxu0
        %v1208 = vadd.f32 0.0, %v1207
        %v1209 = vpop.f32.mrb[0].mxu0
        %1210 = vmatprep.mubr.bf16.mxu0 0
        %1211 = vmatmul.mubr.bf16.gmra.mrb[0].mxu0 %v1106
        %v1212 = vpop.f32.mrb[0].mxu0
        %v1213 = vadd.f32 0.0, %v1212
        %v1214 = vpop.f32.mrb[0].mxu0
        %v1215 = vpop.f32.mrb[0].mxu0
        %v1216 = vadd.f32 0.0, %v1215
        %v1217 = vpop.f32.mrb[0].mxu0
        %1218 = vdwg.mxu0
        %v1219 = vadd.f32 %v1057, %v1152
        %v1220 = vadd.f32 %v1058, %v1154
        %v1221 = vadd.f32 %v1059, %v1205
        %v1222 = vadd.f32 %v1219, %v1156
        %v1223 = vadd.f32 %v1220, %v1158
        %v1224 = vadd.f32 %v1221, %v1208
        %v1225 = vadd.f32 %v1222, %v1162
        %v1226 = vadd.f32 %v1223, %v1164
        %v1227 = vadd.f32 %v1224, %v1213
        %v1228 = vadd.f32 %v1225, %v1166
        %v1229 = vadd.f32 %v1226, %v1168
        %v1230 = vadd.f32 %v1227, %v1216
        %v1231 = vld [vmem:[%s207] sm:$0x3f]
        %s1232 = scalar_lea.vmem %s211, 96
        %v1233 = vld [vmem:[%s1232] sm:$0xf]
        %v1234 = vld [vmem:[%s1232 + $0x4] sm:$0xf]
        %v1235 = vld [vmem:[%s1232 + $0x8] sm:$0xf]
        %v1236 = vld [vmem:[%s1232 + $0xc] sm:$0xf]
        %v1241 = vunpack.c.l.b16 %v1233
        %v1242 = vunpack.c.l.b16 %v1234
        %v1243 = vunpack.c.l.b16 %v1235
        %v1244 = vunpack.c.l.b16 %v1236
        %v1245 = vpack.c.b16 %v1242, %v1241
        %v1246 = vpack.c.b16 %v1244, %v1243
        %v1248 = vcombine.high %v1231, %v1231
        %v1250 = vunpack.c.l.s4 1983009808
        %v1251 = vunpack.c.0.s8 %v1250
        %v1252 = vlaneseq
        %v1253 = vshrl.u32 %v1252, 7
        %v1254 = vsub.s32 %v1251, %v1253
        %v1255 = vrot.slane %v1231, %v1254
        %v1257 = vunpack.c.l.s4 1983009808
        %v1258 = vunpack.c.0.s8 %v1257
        %v1259 = vlaneseq
        %v1260 = vshrl.u32 %v1259, 7
        %v1261 = vsub.s32 %v1258, %v1260
        %v1262 = vrot.slane %v1248, %v1261
        %v1263 = vcombine.high %v1255, %v1255
        %1264 = vrot.lane.b32.xlu0 %v1255, 92
        %v1265 = vpop.permute.xlu0 %1264
        %1266 = vrot.lane.b32.xlu0 %v1263, 92
        %v1267 = vpop.permute.xlu0 %1266
        %1268 = vrot.lane.b32.xlu0 %v1262, 92
        %v1269 = vpop.permute.xlu0 %1268
        %vm1270 = vcmask 752640
        %v1271 = vsel %vm1270, %v1265, %v1267
        %v1272 = vsel %vm1270, %v1267, %v1269
        %v1274 = vsel %vm245, %v1245, 0
        %v1277 = vsel %vm245, %v1246, 0
        %v1280 = vsel %vm252, %v1271, 0
        %v1283 = vsel %vm252, %v1272, 0
        %v1286 = vsel %vm252, %v1269, 0
        %1288 = vmatprep.subr.bf16.mxu0 %v1283
        %1289 = vmatpush1.bf16.msra.mxu0 %v1280
        %1290 = vmatprep.subr.bf16.mxu0 0
        %1291 = vmatpush1.bf16.msra.mxu0 0
        %1292 = vmatprep.subr.bf16.mxu0 0
        %1293 = vmatpush1.bf16.msra.mxu0 0
        %1294 = vmatprep.subr.bf16.mxu0 0
        %1295 = vmatpush1.bf16.msra.mxu0 0
        %1296 = vmatprep.subr.bf16.mxu0 0
        %1297 = vmatpush1.bf16.msra.mxu0 0
        %1298 = vmatprep.subr.bf16.mxu0 0
        %1299 = vmatpush1.bf16.msra.mxu0 0
        %1300 = vmatprep.subr.bf16.mxu0 0
        %1301 = vmatpush1.bf16.msra.mxu0 0
        %1302 = vmatprep.subr.bf16.mxu0 0
        %1303 = vmatpush1.bf16.msra.mxu0 0
        %1304 = vmatprep.subr.bf16.mxu0 0
        %1305 = vmatpush1.bf16.msra.mxu0 0
        %1306 = vmatprep.subr.bf16.mxu0 0
        %1307 = vmatpush1.bf16.msra.mxu0 0
        %1308 = vmatprep.subr.bf16.mxu0 0
        %1309 = vmatpush1.bf16.msra.mxu0 0
        %1310 = vmatprep.subr.bf16.mxu0 0
        %1311 = vmatpush1.bf16.msra.mxu0 0
        %1312 = vmatprep.subr.bf16.mxu0 0
        %1313 = vmatpush1.bf16.msra.mxu0 0
        %1314 = vmatprep.subr.bf16.mxu0 0
        %1315 = vmatpush1.bf16.msra.mxu0 0
        %1316 = vmatprep.subr.bf16.mxu0 0
        %1317 = vmatpush1.bf16.msra.mxu0 0
        %1318 = vmatprep.subr.bf16.mxu0 0
        %1319 = vmatpush1.bf16.msra.mxu0 0
        %1320 = vmatprep.mubr.bf16.mxu0 0
        %1321 = vmatmul.mubr.bf16.gmra.mrb[0].mxu0 %v1274
        %v1322 = vpop.f32.mrb[0].mxu0
        %v1323 = vadd.f32 0.0, %v1322
        %v1324 = vpop.f32.mrb[0].mxu0
        %v1325 = vadd.f32 0.0, %v1324
        %v1326 = vpop.f32.mrb[0].mxu0
        %v1327 = vadd.f32 0.0, %v1326
        %v1328 = vpop.f32.mrb[0].mxu0
        %v1329 = vadd.f32 0.0, %v1328
        %1330 = vmatprep.mubr.bf16.mxu0 0
        %1331 = vmatmul.mubr.bf16.gmra.mrb[0].mxu0 %v1277
        %v1332 = vpop.f32.mrb[0].mxu0
        %v1333 = vadd.f32 0.0, %v1332
        %v1334 = vpop.f32.mrb[0].mxu0
        %v1335 = vadd.f32 0.0, %v1334
        %v1336 = vpop.f32.mrb[0].mxu0
        %v1337 = vadd.f32 0.0, %v1336
        %v1338 = vpop.f32.mrb[0].mxu0
        %v1339 = vadd.f32 0.0, %v1338
        %1340 = vdwg.mxu0
        %1341 = vmatprep.subr.bf16.mxu0 0
        %1342 = vmatpush1.bf16.msra.mxu0 %v1286
        %1343 = vmatprep.subr.bf16.mxu0 0
        %1344 = vmatpush1.bf16.msra.mxu0 0
        %1345 = vmatprep.subr.bf16.mxu0 0
        %1346 = vmatpush1.bf16.msra.mxu0 0
        %1347 = vmatprep.subr.bf16.mxu0 0
        %1348 = vmatpush1.bf16.msra.mxu0 0
        %1349 = vmatprep.subr.bf16.mxu0 0
        %1350 = vmatpush1.bf16.msra.mxu0 0
        %1351 = vmatprep.subr.bf16.mxu0 0
        %1352 = vmatpush1.bf16.msra.mxu0 0
        %1353 = vmatprep.subr.bf16.mxu0 0
        %1354 = vmatpush1.bf16.msra.mxu0 0
        %1355 = vmatprep.subr.bf16.mxu0 0
        %1356 = vmatpush1.bf16.msra.mxu0 0
        %1357 = vmatprep.subr.bf16.mxu0 0
        %1358 = vmatpush1.bf16.msra.mxu0 0
        %1359 = vmatprep.subr.bf16.mxu0 0
        %1360 = vmatpush1.bf16.msra.mxu0 0
        %1361 = vmatprep.subr.bf16.mxu0 0
        %1362 = vmatpush1.bf16.msra.mxu0 0
        %1363 = vmatprep.subr.bf16.mxu0 0
        %1364 = vmatpush1.bf16.msra.mxu0 0
        %1365 = vmatprep.subr.bf16.mxu0 0
        %1366 = vmatpush1.bf16.msra.mxu0 0
        %1367 = vmatprep.subr.bf16.mxu0 0
        %1368 = vmatpush1.bf16.msra.mxu0 0
        %1369 = vmatprep.subr.bf16.mxu0 0
        %1370 = vmatpush1.bf16.msra.mxu0 0
        %1371 = vmatprep.subr.bf16.mxu0 0
        %1372 = vmatpush1.bf16.msra.mxu0 0
        %1373 = vmatprep.mubr.bf16.mxu0 0
        %1374 = vmatmul.mubr.bf16.gmra.mrb[0].mxu0 %v1274
        %v1375 = vpop.f32.mrb[0].mxu0
        %v1376 = vadd.f32 0.0, %v1375
        %v1377 = vpop.f32.mrb[0].mxu0
        %v1378 = vpop.f32.mrb[0].mxu0
        %v1379 = vadd.f32 0.0, %v1378
        %v1380 = vpop.f32.mrb[0].mxu0
        %1381 = vmatprep.mubr.bf16.mxu0 0
        %1382 = vmatmul.mubr.bf16.gmra.mrb[0].mxu0 %v1277
        %v1383 = vpop.f32.mrb[0].mxu0
        %v1384 = vadd.f32 0.0, %v1383
        %v1385 = vpop.f32.mrb[0].mxu0
        %v1386 = vpop.f32.mrb[0].mxu0
        %v1387 = vadd.f32 0.0, %v1386
        %v1388 = vpop.f32.mrb[0].mxu0
        %1389 = vdwg.mxu0
        %v1390 = vadd.f32 %v1228, %v1323
        %v1391 = vadd.f32 %v1229, %v1325
        %v1392 = vadd.f32 %v1230, %v1376
        %v1393 = vadd.f32 %v1390, %v1327
        %v1394 = vadd.f32 %v1391, %v1329
        %v1395 = vadd.f32 %v1392, %v1379
        %v1396 = vadd.f32 %v1393, %v1333
        %v1397 = vadd.f32 %v1394, %v1335
        %v1398 = vadd.f32 %v1395, %v1384
        %v1399 = vadd.f32 %v1396, %v1337
        %v1400 = vadd.f32 %v1397, %v1339
        %v1401 = vadd.f32 %v1398, %v1387
        %v1402 = vld [vmem:[%s207] sm:$0x3f]
        %s1403 = scalar_lea.vmem %s211, 112
        %v1404 = vld [vmem:[%s1403] sm:$0xf]
        %v1405 = vld [vmem:[%s1403 + $0x4] sm:$0xf]
        %v1406 = vld [vmem:[%s1403 + $0x8] sm:$0xf]
        %v1407 = vld [vmem:[%s1403 + $0xc] sm:$0xf]
        %v1412 = vunpack.c.l.b16 %v1404
        %v1413 = vunpack.c.l.b16 %v1405
        %v1414 = vunpack.c.l.b16 %v1406
        %v1415 = vunpack.c.l.b16 %v1407
        %v1416 = vpack.c.b16 %v1413, %v1412
        %v1417 = vpack.c.b16 %v1415, %v1414
        %v1419 = vcombine.high %v1402, %v1402
        %v1421 = vunpack.c.l.s4 1983009808
        %v1422 = vunpack.c.0.s8 %v1421
        %v1423 = vlaneseq
        %v1424 = vshrl.u32 %v1423, 7
        %v1425 = vsub.s32 %v1422, %v1424
        %v1426 = vrot.slane %v1402, %v1425
        %v1428 = vunpack.c.l.s4 1983009808
        %v1429 = vunpack.c.0.s8 %v1428
        %v1430 = vlaneseq
        %v1431 = vshrl.u32 %v1430, 7
        %v1432 = vsub.s32 %v1429, %v1431
        %v1433 = vrot.slane %v1419, %v1432
        %v1434 = vcombine.high %v1426, %v1426
        %1435 = vrot.lane.b32.xlu0 %v1426, 91
        %v1436 = vpop.permute.xlu0 %1435
        %1437 = vrot.lane.b32.xlu0 %v1434, 91
        %v1438 = vpop.permute.xlu0 %1437
        %1439 = vrot.lane.b32.xlu0 %v1433, 91
        %v1440 = vpop.permute.xlu0 %1439
        %vm1441 = vcmask 744448
        %v1442 = vsel %vm1441, %v1436, %v1438
        %v1443 = vsel %vm1441, %v1438, %v1440
        %v1445 = vsel %vm245, %v1416, 0
        %v1448 = vsel %vm245, %v1417, 0
        %v1451 = vsel %vm252, %v1442, 0
        %v1454 = vsel %vm252, %v1443, 0
        %v1457 = vsel %vm252, %v1440, 0
        %1459 = vmatprep.subr.bf16.mxu0 %v1454
        %1460 = vmatpush1.bf16.msra.mxu0 %v1451
        %1461 = vmatprep.subr.bf16.mxu0 0
        %1462 = vmatpush1.bf16.msra.mxu0 0
        %1463 = vmatprep.subr.bf16.mxu0 0
        %1464 = vmatpush1.bf16.msra.mxu0 0
        %1465 = vmatprep.subr.bf16.mxu0 0
        %1466 = vmatpush1.bf16.msra.mxu0 0
        %1467 = vmatprep.subr.bf16.mxu0 0
        %1468 = vmatpush1.bf16.msra.mxu0 0
        %1469 = vmatprep.subr.bf16.mxu0 0
        %1470 = vmatpush1.bf16.msra.mxu0 0
        %1471 = vmatprep.subr.bf16.mxu0 0
        %1472 = vmatpush1.bf16.msra.mxu0 0
        %1473 = vmatprep.subr.bf16.mxu0 0
        %1474 = vmatpush1.bf16.msra.mxu0 0
        %1475 = vmatprep.subr.bf16.mxu0 0
        %1476 = vmatpush1.bf16.msra.mxu0 0
        %1477 = vmatprep.subr.bf16.mxu0 0
        %1478 = vmatpush1.bf16.msra.mxu0 0
        %1479 = vmatprep.subr.bf16.mxu0 0
        %1480 = vmatpush1.bf16.msra.mxu0 0
        %1481 = vmatprep.subr.bf16.mxu0 0
        %1482 = vmatpush1.bf16.msra.mxu0 0
        %1483 = vmatprep.subr.bf16.mxu0 0
        %1484 = vmatpush1.bf16.msra.mxu0 0
        %1485 = vmatprep.subr.bf16.mxu0 0
        %1486 = vmatpush1.bf16.msra.mxu0 0
        %1487 = vmatprep.subr.bf16.mxu0 0
        %1488 = vmatpush1.bf16.msra.mxu0 0
        %1489 = vmatprep.subr.bf16.mxu0 0
        %1490 = vmatpush1.bf16.msra.mxu0 0
        %1491 = vmatprep.mubr.bf16.mxu0 0
        %1492 = vmatmul.mubr.bf16.gmra.mrb[0].mxu0 %v1445
        %v1493 = vpop.f32.mrb[0].mxu0
        %v1494 = vadd.f32 0.0, %v1493
        %v1495 = vpop.f32.mrb[0].mxu0
        %v1496 = vadd.f32 0.0, %v1495
        %v1497 = vpop.f32.mrb[0].mxu0
        %v1498 = vadd.f32 0.0, %v1497
        %v1499 = vpop.f32.mrb[0].mxu0
        %v1500 = vadd.f32 0.0, %v1499
        %1501 = vmatprep.mubr.bf16.mxu0 0
        %1502 = vmatmul.mubr.bf16.gmra.mrb[0].mxu0 %v1448
        %v1503 = vpop.f32.mrb[0].mxu0
        %v1504 = vadd.f32 0.0, %v1503
        %v1505 = vpop.f32.mrb[0].mxu0
        %v1506 = vadd.f32 0.0, %v1505
        %v1507 = vpop.f32.mrb[0].mxu0
        %v1508 = vadd.f32 0.0, %v1507
        %v1509 = vpop.f32.mrb[0].mxu0
        %v1510 = vadd.f32 0.0, %v1509
        %1511 = vdwg.mxu0
        %1512 = vmatprep.subr.bf16.mxu0 0
        %1513 = vmatpush1.bf16.msra.mxu0 %v1457
        %1514 = vmatprep.subr.bf16.mxu0 0
        %1515 = vmatpush1.bf16.msra.mxu0 0
        %1516 = vmatprep.subr.bf16.mxu0 0
        %1517 = vmatpush1.bf16.msra.mxu0 0
        %1518 = vmatprep.subr.bf16.mxu0 0
        %1519 = vmatpush1.bf16.msra.mxu0 0
        %1520 = vmatprep.subr.bf16.mxu0 0
        %1521 = vmatpush1.bf16.msra.mxu0 0
        %1522 = vmatprep.subr.bf16.mxu0 0
        %1523 = vmatpush1.bf16.msra.mxu0 0
        %1524 = vmatprep.subr.bf16.mxu0 0
        %1525 = vmatpush1.bf16.msra.mxu0 0
        %1526 = vmatprep.subr.bf16.mxu0 0
        %1527 = vmatpush1.bf16.msra.mxu0 0
        %1528 = vmatprep.subr.bf16.mxu0 0
        %1529 = vmatpush1.bf16.msra.mxu0 0
        %1530 = vmatprep.subr.bf16.mxu0 0
        %1531 = vmatpush1.bf16.msra.mxu0 0
        %1532 = vmatprep.subr.bf16.mxu0 0
        %1533 = vmatpush1.bf16.msra.mxu0 0
        %1534 = vmatprep.subr.bf16.mxu0 0
        %1535 = vmatpush1.bf16.msra.mxu0 0
        %1536 = vmatprep.subr.bf16.mxu0 0
        %1537 = vmatpush1.bf16.msra.mxu0 0
        %1538 = vmatprep.subr.bf16.mxu0 0
        %1539 = vmatpush1.bf16.msra.mxu0 0
        %1540 = vmatprep.subr.bf16.mxu0 0
        %1541 = vmatpush1.bf16.msra.mxu0 0
        %1542 = vmatprep.subr.bf16.mxu0 0
        %1543 = vmatpush1.bf16.msra.mxu0 0
        %1544 = vmatprep.mubr.bf16.mxu0 0
        %1545 = vmatmul.mubr.bf16.gmra.mrb[0].mxu0 %v1445
        %v1546 = vpop.f32.mrb[0].mxu0
        %v1547 = vadd.f32 0.0, %v1546
        %v1548 = vpop.f32.mrb[0].mxu0
        %v1549 = vpop.f32.mrb[0].mxu0
        %v1550 = vadd.f32 0.0, %v1549
        %v1551 = vpop.f32.mrb[0].mxu0
        %1552 = vmatprep.mubr.bf16.mxu0 0
        %1553 = vmatmul.mubr.bf16.gmra.mrb[0].mxu0 %v1448
        %v1554 = vpop.f32.mrb[0].mxu0
        %v1555 = vadd.f32 0.0, %v1554
        %v1556 = vpop.f32.mrb[0].mxu0
        %v1557 = vpop.f32.mrb[0].mxu0
        %v1558 = vadd.f32 0.0, %v1557
        %v1559 = vpop.f32.mrb[0].mxu0
        %1560 = vdwg.mxu0
        %v1561 = vadd.f32 %v1399, %v1494
        %v1562 = vadd.f32 %v1400, %v1496
        %v1563 = vadd.f32 %v1401, %v1547
        %v1564 = vadd.f32 %v1561, %v1498
        %v1565 = vadd.f32 %v1562, %v1500
        %v1566 = vadd.f32 %v1563, %v1550
        %v1567 = vadd.f32 %v1564, %v1504
        %v1568 = vadd.f32 %v1565, %v1506
        %v1569 = vadd.f32 %v1566, %v1555
        %v1570 = vadd.f32 %v1567, %v1508
        %v1571 = vadd.f32 %v1568, %v1510
        %v1572 = vadd.f32 %v1569, %v1558
        %v1573 = vld [vmem:[%s207] sm:$0x3f]
        %s1574 = scalar_lea.vmem %s211, 128
        %v1575 = vld [vmem:[%s1574] sm:$0xf]
        %v1576 = vld [vmem:[%s1574 + $0x4] sm:$0xf]
        %v1577 = vld [vmem:[%s1574 + $0x8] sm:$0xf]
        %v1578 = vld [vmem:[%s1574 + $0xc] sm:$0xf]
        %v1583 = vunpack.c.l.b16 %v1575
        %v1584 = vunpack.c.l.b16 %v1576
        %v1585 = vunpack.c.l.b16 %v1577
        %v1586 = vunpack.c.l.b16 %v1578
        %v1587 = vpack.c.b16 %v1584, %v1583
        %v1588 = vpack.c.b16 %v1586, %v1585
        %v1590 = vcombine.high %v1573, %v1573
        %v1592 = vunpack.c.l.s4 1983009808
        %v1593 = vunpack.c.0.s8 %v1592
        %v1594 = vlaneseq
        %v1595 = vshrl.u32 %v1594, 7
        %v1596 = vsub.s32 %v1593, %v1595
        %v1597 = vrot.slane %v1573, %v1596
        %v1599 = vunpack.c.l.s4 1983009808
        %v1600 = vunpack.c.0.s8 %v1599
        %v1601 = vlaneseq
        %v1602 = vshrl.u32 %v1601, 7
        %v1603 = vsub.s32 %v1600, %v1602
        %v1604 = vrot.slane %v1590, %v1603
        %v1605 = vcombine.high %v1597, %v1597
        %1606 = vrot.lane.b32.xlu0 %v1597, 90
        %v1607 = vpop.permute.xlu0 %1606
        %1608 = vrot.lane.b32.xlu0 %v1605, 90
        %v1609 = vpop.permute.xlu0 %1608
        %1610 = vrot.lane.b32.xlu0 %v1604, 90
        %v1611 = vpop.permute.xlu0 %1610
        %vm1612 = vcmask 736256
        %v1613 = vsel %vm1612, %v1607, %v1609
        %v1614 = vsel %vm1612, %v1609, %v1611
        %v1616 = vsel %vm245, %v1587, 0
        %v1619 = vsel %vm245, %v1588, 0
        %v1622 = vsel %vm252, %v1613, 0
        %v1625 = vsel %vm252, %v1614, 0
        %v1628 = vsel %vm252, %v1611, 0
        %1630 = vmatprep.subr.bf16.mxu0 %v1625
        %1631 = vmatpush1.bf16.msra.mxu0 %v1622
        %1632 = vmatprep.subr.bf16.mxu0 0
        %1633 = vmatpush1.bf16.msra.mxu0 0
        %1634 = vmatprep.subr.bf16.mxu0 0
        %1635 = vmatpush1.bf16.msra.mxu0 0
        %1636 = vmatprep.subr.bf16.mxu0 0
        %1637 = vmatpush1.bf16.msra.mxu0 0
        %1638 = vmatprep.subr.bf16.mxu0 0
        %1639 = vmatpush1.bf16.msra.mxu0 0
        %1640 = vmatprep.subr.bf16.mxu0 0
        %1641 = vmatpush1.bf16.msra.mxu0 0
        %1642 = vmatprep.subr.bf16.mxu0 0
        %1643 = vmatpush1.bf16.msra.mxu0 0
        %1644 = vmatprep.subr.bf16.mxu0 0
        %1645 = vmatpush1.bf16.msra.mxu0 0
        %1646 = vmatprep.subr.bf16.mxu0 0
        %1647 = vmatpush1.bf16.msra.mxu0 0
        %1648 = vmatprep.subr.bf16.mxu0 0
        %1649 = vmatpush1.bf16.msra.mxu0 0
        %1650 = vmatprep.subr.bf16.mxu0 0
        %1651 = vmatpush1.bf16.msra.mxu0 0
        %1652 = vmatprep.subr.bf16.mxu0 0
        %1653 = vmatpush1.bf16.msra.mxu0 0
        %1654 = vmatprep.subr.bf16.mxu0 0
        %1655 = vmatpush1.bf16.msra.mxu0 0
        %1656 = vmatprep.subr.bf16.mxu0 0
        %1657 = vmatpush1.bf16.msra.mxu0 0
        %1658 = vmatprep.subr.bf16.mxu0 0
        %1659 = vmatpush1.bf16.msra.mxu0 0
        %1660 = vmatprep.subr.bf16.mxu0 0
        %1661 = vmatpush1.bf16.msra.mxu0 0
        %1662 = vmatprep.mubr.bf16.mxu0 0
        %1663 = vmatmul.mubr.bf16.gmra.mrb[0].mxu0 %v1616
        %v1664 = vpop.f32.mrb[0].mxu0
        %v1665 = vadd.f32 0.0, %v1664
        %v1666 = vpop.f32.mrb[0].mxu0
        %v1667 = vadd.f32 0.0, %v1666
        %v1668 = vpop.f32.mrb[0].mxu0
        %v1669 = vadd.f32 0.0, %v1668
        %v1670 = vpop.f32.mrb[0].mxu0
        %v1671 = vadd.f32 0.0, %v1670
        %1672 = vmatprep.mubr.bf16.mxu0 0
        %1673 = vmatmul.mubr.bf16.gmra.mrb[0].mxu0 %v1619
        %v1674 = vpop.f32.mrb[0].mxu0
        %v1675 = vadd.f32 0.0, %v1674
        %v1676 = vpop.f32.mrb[0].mxu0
        %v1677 = vadd.f32 0.0, %v1676
        %v1678 = vpop.f32.mrb[0].mxu0
        %v1679 = vadd.f32 0.0, %v1678
        %v1680 = vpop.f32.mrb[0].mxu0
        %v1681 = vadd.f32 0.0, %v1680
        %1682 = vdwg.mxu0
        %1683 = vmatprep.subr.bf16.mxu0 0
        %1684 = vmatpush1.bf16.msra.mxu0 %v1628
        %1685 = vmatprep.subr.bf16.mxu0 0
        %1686 = vmatpush1.bf16.msra.mxu0 0
        %1687 = vmatprep.subr.bf16.mxu0 0
        %1688 = vmatpush1.bf16.msra.mxu0 0
        %1689 = vmatprep.subr.bf16.mxu0 0
        %1690 = vmatpush1.bf16.msra.mxu0 0
        %1691 = vmatprep.subr.bf16.mxu0 0
        %1692 = vmatpush1.bf16.msra.mxu0 0
        %1693 = vmatprep.subr.bf16.mxu0 0
        %1694 = vmatpush1.bf16.msra.mxu0 0
        %1695 = vmatprep.subr.bf16.mxu0 0
        %1696 = vmatpush1.bf16.msra.mxu0 0
        %1697 = vmatprep.subr.bf16.mxu0 0
        %1698 = vmatpush1.bf16.msra.mxu0 0
        %1699 = vmatprep.subr.bf16.mxu0 0
        %1700 = vmatpush1.bf16.msra.mxu0 0
        %1701 = vmatprep.subr.bf16.mxu0 0
        %1702 = vmatpush1.bf16.msra.mxu0 0
        %1703 = vmatprep.subr.bf16.mxu0 0
        %1704 = vmatpush1.bf16.msra.mxu0 0
        %1705 = vmatprep.subr.bf16.mxu0 0
        %1706 = vmatpush1.bf16.msra.mxu0 0
        %1707 = vmatprep.subr.bf16.mxu0 0
        %1708 = vmatpush1.bf16.msra.mxu0 0
        %1709 = vmatprep.subr.bf16.mxu0 0
        %1710 = vmatpush1.bf16.msra.mxu0 0
        %1711 = vmatprep.subr.bf16.mxu0 0
        %1712 = vmatpush1.bf16.msra.mxu0 0
        %1713 = vmatprep.subr.bf16.mxu0 0
        %1714 = vmatpush1.bf16.msra.mxu0 0
        %1715 = vmatprep.mubr.bf16.mxu0 0
        %1716 = vmatmul.mubr.bf16.gmra.mrb[0].mxu0 %v1616
        %v1717 = vpop.f32.mrb[0].mxu0
        %v1718 = vadd.f32 0.0, %v1717
        %v1719 = vpop.f32.mrb[0].mxu0
        %v1720 = vpop.f32.mrb[0].mxu0
        %v1721 = vadd.f32 0.0, %v1720
        %v1722 = vpop.f32.mrb[0].mxu0
        %1723 = vmatprep.mubr.bf16.mxu0 0
        %1724 = vmatmul.mubr.bf16.gmra.mrb[0].mxu0 %v1619
        %v1725 = vpop.f32.mrb[0].mxu0
        %v1726 = vadd.f32 0.0, %v1725
        %v1727 = vpop.f32.mrb[0].mxu0
        %v1728 = vpop.f32.mrb[0].mxu0
        %v1729 = vadd.f32 0.0, %v1728
        %v1730 = vpop.f32.mrb[0].mxu0
        %1731 = vdwg.mxu0
        %v1732 = vadd.f32 %v1570, %v1665
        %v1733 = vadd.f32 %v1571, %v1667
        %v1734 = vadd.f32 %v1572, %v1718
        %v1735 = vadd.f32 %v1732, %v1669
        %v1736 = vadd.f32 %v1733, %v1671
        %v1737 = vadd.f32 %v1734, %v1721
        %v1738 = vadd.f32 %v1735, %v1675
        %v1739 = vadd.f32 %v1736, %v1677
        %v1740 = vadd.f32 %v1737, %v1726
        %v1741 = vadd.f32 %v1738, %v1679
        %v1742 = vadd.f32 %v1739, %v1681
        %v1743 = vadd.f32 %v1740, %v1729
        %p1744 = scmp.eq.s32.totalorder %s22, 0
        // Predicated region
        $region33: #{tpu_custom_call.1} parent=31 // pred_check
          %p1745 = pneg %p1744
        $region34: #{tpu_custom_call.1} parent=31 // pred_check_branch
          %1747 = sbr.rel (%p1745) target = $region36
        $region35: #{tpu_custom_call.1} parent=31 // pred_region
          %1748 = vst [vmem:[#allocation2] sm:$0xff] %v1741
          %1749 = vst [vmem:[#allocation2 + $0x8] sm:$0xff] %v1742
          %vm1750 = vcmask 261120
          %1751 = vst.msk [vmem:[#allocation2 + $0x10] sm:$0xff] %vm1750, %v1743
        $region36: #{tpu_custom_call.1} parent=31 // pred_fallthru
          _
        %p1752 = scmp.gt.s32.totalorder %s22, 0
        // Predicated region
        $region37: #{tpu_custom_call.1} parent=31 // pred_check
          %p1753 = pneg %p1752
        $region38: #{tpu_custom_call.1} parent=31 // pred_check_branch
          %1755 = sbr.rel (%p1753) target = $region40
        $region39: #{tpu_custom_call.1} parent=31 // pred_region
          %v1756 = vld [vmem:[#allocation2] sm:$0xff]
          %v1757 = vld [vmem:[#allocation2 + $0x8] sm:$0xff]
          %v1758 = vld [vmem:[#allocation2 + $0x10] sm:$0xff]
          %v1759 = vadd.f32 %v1756, %v1741
          %v1760 = vadd.f32 %v1757, %v1742
          %v1761 = vadd.f32 %v1758, %v1743
          %1762 = vst [vmem:[#allocation2] sm:$0xff] %v1759
          %1763 = vst [vmem:[#allocation2 + $0x8] sm:$0xff] %v1760
          %vm1764 = vcmask 261120
          %1765 = vst.msk [vmem:[#allocation2 + $0x10] sm:$0xff] %vm1764, %v1761
        $region40: #{tpu_custom_call.1} parent=31 // pred_fallthru
          _
        // Predicated region
        $region41: #{tpu_custom_call.1} parent=31 // pred_check
          %p1766 = pneg %p1744
        $region42: #{tpu_custom_call.1} parent=31 // pred_check_branch
          %1768 = sbr.rel (%p1766) target = $region44
        $region43: #{tpu_custom_call.1} parent=31 // pred_region
          %v1769 = vld [vmem:[#allocation2] sm:$0xff]
          %v1770 = vld [vmem:[#allocation2 + $0x8] sm:$0xff]
          %v1771 = vld [vmem:[#allocation2 + $0x10] sm:$0xff]
          %v1772 = vmul.f32 %v1769, 0.25
          %v1773 = vmul.f32 %v1770, 0.25
          %v1774 = vmul.f32 %v1771, 0.25
          %v1775 = vld [vmem:[%s2] sm:$0xff]
          %1777 = vset.pattern.permute.xlu0 0
          %1778 = vperm.xlu0 %1777, %v1775
          %v1779 = vpop.permute.xlu0 %1778
          %v1781 = vadd.f32 %v1772, %v1779
          %v1782 = vadd.f32 %v1773, %v1779
          %v1783 = vadd.f32 %v1774, %v1779
          %1785 = vrot.lane.b32.xlu0 %v1781, 110
          %v1786 = vpop.permute.xlu0 %1785
          %1788 = vrot.lane.b32.xlu0 %v1781, 92
          %v1789 = vpop.permute.xlu0 %1788
          %1791 = vrot.lane.b32.xlu0 %v1781, 74
          %v1792 = vpop.permute.xlu0 %1791
          %1794 = vrot.lane.b32.xlu0 %v1781, 56
          %v1795 = vpop.permute.xlu0 %1794
          %1797 = vrot.lane.b32.xlu0 %v1781, 38
          %v1798 = vpop.permute.xlu0 %1797
          %1800 = vrot.lane.b32.xlu0 %v1781, 20
          %v1801 = vpop.permute.xlu0 %1800
          %1804 = vrot.lane.b32.xlu0 %v1781, 2
          %v1805 = vpop.permute.xlu0 %1804
          %1806 = vrot.lane.b32.xlu0 %v1782, 2
          %v1807 = vpop.permute.xlu0 %1806
          %vm1808 = vcmask 15360
          %v1809 = vsel %vm1808, %v1805, %v1807
          %1811 = vrot.lane.b32.xlu0 %v1782, 112
          %v1812 = vpop.permute.xlu0 %1811
          %1814 = vrot.lane.b32.xlu0 %v1782, 94
          %v1815 = vpop.permute.xlu0 %1814
          %1817 = vrot.lane.b32.xlu0 %v1782, 76
          %v1818 = vpop.permute.xlu0 %1817
          %1820 = vrot.lane.b32.xlu0 %v1782, 58
          %v1821 = vpop.permute.xlu0 %1820
          %1823 = vrot.lane.b32.xlu0 %v1782, 40
          %v1824 = vpop.permute.xlu0 %1823
          %1826 = vrot.lane.b32.xlu0 %v1782, 22
          %v1827 = vpop.permute.xlu0 %1826
          %1830 = vrot.lane.b32.xlu0 %v1782, 4
          %v1831 = vpop.permute.xlu0 %1830
          %1832 = vrot.lane.b32.xlu0 %v1783, 4
          %v1833 = vpop.permute.xlu0 %1832
          %v1834 = vsel %vm245, %v1831, %v1833
          %1836 = vrot.lane.b32.xlu0 %v1783, 114
          %v1837 = vpop.permute.xlu0 %1836
          %v1839 = vcombine.low %v1781, %v1789
          %v1841 = vunpack.c.l.s4 1983009808
          %v1842 = vunpack.c.0.s8 %v1841
          %v1843 = vlaneseq
          %v1844 = vshrl.u32 %v1843, 7
          %v1845 = vsub.s32 %v1842, %v1844
          %v1846 = vrot.slane %v1839, %v1845
          %v1847 = vcombine.low %v1786, %v1792
          %v1849 = vunpack.c.l.s4 1983009808
          %v1850 = vunpack.c.0.s8 %v1849
          %v1851 = vlaneseq
          %v1852 = vshrl.u32 %v1851, 7
          %v1853 = vsub.s32 %v1850, %v1852
          %v1854 = vrot.slane %v1847, %v1853
          %v1855 = vcombine.low %v1795, %v1801
          %v1857 = vunpack.c.l.s4 1983009808
          %v1858 = vunpack.c.0.s8 %v1857
          %v1859 = vlaneseq
          %v1860 = vshrl.u32 %v1859, 7
          %v1861 = vsub.s32 %v1858, %v1860
          %v1862 = vrot.slane %v1855, %v1861
          %v1863 = vcombine.low %v1798, %v1809
          %v1865 = vunpack.c.l.s4 1983009808
          %v1866 = vunpack.c.0.s8 %v1865
          %v1867 = vlaneseq
          %v1868 = vshrl.u32 %v1867, 7
          %v1869 = vsub.s32 %v1866, %v1868
          %v1870 = vrot.slane %v1863, %v1869
          %v1871 = vcombine.low %v1846, %v1854
          %v1872 = vcombine.high %v1846, %v1854
          %v1874 = vunpack.c.l.s4 1934713408
          %v1875 = vunpack.c.0.s8 %v1874
          %v1876 = vlaneseq
          %v1877 = vshrl.u32 %v1876, 7
          %v1878 = vsub.s32 %v1875, %v1877
          %v1879 = vrot.slane %v1871, %v1878
          %v1881 = vunpack.c.l.s4 1934713408
          %v1882 = vunpack.c.0.s8 %v1881
          %v1883 = vlaneseq
          %v1884 = vshrl.u32 %v1883, 7
          %v1885 = vsub.s32 %v1882, %v1884
          %v1886 = vrot.slane %v1872, %v1885
          %v1887 = vcombine.low %v1862, %v1870
          %v1888 = vcombine.high %v1862, %v1870
          %v1890 = vunpack.c.l.s4 1934713408
          %v1891 = vunpack.c.0.s8 %v1890
          %v1892 = vlaneseq
          %v1893 = vshrl.u32 %v1892, 7
          %v1894 = vsub.s32 %v1891, %v1893
          %v1895 = vrot.slane %v1887, %v1894
          %v1897 = vunpack.c.l.s4 1934713408
          %v1898 = vunpack.c.0.s8 %v1897
          %v1899 = vlaneseq
          %v1900 = vshrl.u32 %v1899, 7
          %v1901 = vsub.s32 %v1898, %v1900
          %v1902 = vrot.slane %v1888, %v1901
          %v1903 = vcombine.low %v1879, %v1895
          %v1904 = vcombine.high %v1879, %v1895
          %v1905 = vcombine.low %v1886, %v1902
          %v1906 = vcombine.low %v1812, %v1818
          %v1908 = vunpack.c.l.s4 1983009808
          %v1909 = vunpack.c.0.s8 %v1908
          %v1910 = vlaneseq
          %v1911 = vshrl.u32 %v1910, 7
          %v1912 = vsub.s32 %v1909, %v1911
          %v1913 = vrot.slane %v1906, %v1912
          %v1914 = vcombine.low %v1815, %v1821
          %v1916 = vunpack.c.l.s4 1983009808
          %v1917 = vunpack.c.0.s8 %v1916
          %v1918 = vlaneseq
          %v1919 = vshrl.u32 %v1918, 7
          %v1920 = vsub.s32 %v1917, %v1919
          %v1921 = vrot.slane %v1914, %v1920
          %v1922 = vcombine.low %v1824, %v1834
          %v1924 = vunpack.c.l.s4 1983009808
          %v1925 = vunpack.c.0.s8 %v1924
          %v1926 = vlaneseq
          %v1927 = vshrl.u32 %v1926, 7
          %v1928 = vsub.s32 %v1925, %v1927
          %v1929 = vrot.slane %v1922, %v1928
          %v1930 = vcombine.low %v1827, %v1837
          %v1932 = vunpack.c.l.s4 1983009808
          %v1933 = vunpack.c.0.s8 %v1932
          %v1934 = vlaneseq
          %v1935 = vshrl.u32 %v1934, 7
          %v1936 = vsub.s32 %v1933, %v1935
          %v1937 = vrot.slane %v1930, %v1936
          %v1938 = vcombine.low %v1913, %v1921
          %v1939 = vcombine.high %v1913, %v1921
          %v1941 = vunpack.c.l.s4 1934713408
          %v1942 = vunpack.c.0.s8 %v1941
          %v1943 = vlaneseq
          %v1944 = vshrl.u32 %v1943, 7
          %v1945 = vsub.s32 %v1942, %v1944
          %v1946 = vrot.slane %v1938, %v1945
          %v1948 = vunpack.c.l.s4 1934713408
          %v1949 = vunpack.c.0.s8 %v1948
          %v1950 = vlaneseq
          %v1951 = vshrl.u32 %v1950, 7
          %v1952 = vsub.s32 %v1949, %v1951
          %v1953 = vrot.slane %v1939, %v1952
          %v1954 = vcombine.low %v1929, %v1937
          %v1955 = vcombine.high %v1929, %v1937
          %v1957 = vunpack.c.l.s4 1934713408
          %v1958 = vunpack.c.0.s8 %v1957
          %v1959 = vlaneseq
          %v1960 = vshrl.u32 %v1959, 7
          %v1961 = vsub.s32 %v1958, %v1960
          %v1962 = vrot.slane %v1954, %v1961
          %v1964 = vunpack.c.l.s4 1934713408
          %v1965 = vunpack.c.0.s8 %v1964
          %v1966 = vlaneseq
          %v1967 = vshrl.u32 %v1966, 7
          %v1968 = vsub.s32 %v1965, %v1967
          %v1969 = vrot.slane %v1955, %v1968
          %v1970 = vcombine.low %v1946, %v1962
          %v1971 = vcombine.high %v1946, %v1962
          %v1972 = vcombine.low %v1953, %v1969
          %vm1973 = vcmask 130048
          %1974 = vst.msk [vmem:[%s198] sm:$0xff] %vm1973, %v1903
          %1975 = vst.msk [vmem:[%s198 + $0x8] sm:$0xff] %vm1973, %v1970
          %1976 = vst.msk [vmem:[%s198 + $0x10] sm:$0xff] %vm1973, %v1904
          %1977 = vst.msk [vmem:[%s198 + $0x18] sm:$0xff] %vm1973, %v1971
          %1978 = vst.msk [vmem:[%s198 + $0x20] sm:$0xff] %vm1973, %v1905
          %1979 = vst.msk [vmem:[%s198 + $0x28] sm:$0xff] %vm1973, %v1972
        $region44: #{tpu_custom_call.1} parent=31 // pred_fallthru
          _
        %s1980 = sand.u32 %s112, 1
        %s1981 = scalar_lea.sflag [#allocation4], %s1980
        %s1982 = sand.u32 %s112, 1
        %s1983 = smul.addr %s1982, 48
        %s1984 = scalar_lea.vmem [#allocation3], %s1983
        // Predicated region
        $region45: #{tpu_custom_call.1} parent=31 // pred_check
          %p1985 = pneg %p122
        $region46: #{tpu_custom_call.1} parent=31 // pred_check_branch
          %1987 = sbr.rel (%p1985) target = $region48
        $region47: #{tpu_custom_call.1} parent=31 // pred_region
          %s1989 = ssub.s32 768, 768
          %1990 = vsyncadd %s1981, %s1989
          %s1991 = smul.addr %s21, 6
          %s1992 = smul.addr %s1991, 128
          %s1993 = scalar_lea.hbm %s3, %s1992
          %s1994 = sshll.u32 %s1984, 4
          %s1995 = int_to_ptr.vmem [resolvable:$true] %s1994
          %2000 = dma.vmem_to_hbm [thread:$0]  %s1995, 768, %s1993, %s1981, 128, 128, 8
        $region48: #{tpu_custom_call.1} parent=31 // pred_fallthru
          _
      $region32: #{tpu_custom_call.1} parent=5 // pred_fallthru
        _
      %p2001 = scmp.le.s32.totalorder 2, %s12
      // Predicated region
      $region49: #{tpu_custom_call.1} parent=5 // pred_check
        %p2002 = pneg %p2001
      $region50: #{tpu_custom_call.1} parent=5 // pred_check_branch
        %2004 = sbr.rel (%p2002) target = $region52
      $region51: #{tpu_custom_call.1} parent=5 // pred_region
        %s2005 = ssub.s32 %s12, 2
        // Predicated region
        $region53: #{tpu_custom_call.1} parent=51 // pred_check
          %p2006 = pneg %p128
        $region54: #{tpu_custom_call.1} parent=51 // pred_check_branch
          %2008 = sbr.rel (%p2006) target = $region56
        $region55: #{tpu_custom_call.1} parent=51 // pred_region
          %s2009 = sand.u32 %s113, 1
          %s2010 = scalar_lea.sflag [#allocation4], %s2009
          %s2011 = sand.u32 %s113, 1
          %s2012 = smul.addr %s2011, 48
          %s2013 = scalar_lea.vmem [#allocation3], %s2012
          %2014 = dma.done %s2010, 768
        $region56: #{tpu_custom_call.1} parent=51 // pred_fallthru
          _
      $region52: #{tpu_custom_call.1} parent=5 // pred_fallthru
        _
    $region6: #{tpu_custom_call.1} parent=1 // loop_footer
      %s16 = sadd.s32 1, %s12
    $region7: #{tpu_custom_call.1} parent=1 // loop_footer_branch
      %11 = sbr.rel target = $region3
    $region8: #{tpu_custom_call.1} parent=1 // loop_exit
      _
    %2015 = vsyncpa [#allocation4], 1
    %s2016 = scalar_lea.sflag [#allocation4], 1
    %2017 = vsyncpa %s2016, 1

</llo_original>
